<compile_context>
chip_gen: v7x
topology: tpu7x:2x2x1
jax: 0.10.0
libtpu: 0.0.40
codegen_flags: <defaults>
</compile_context>

<pallas_src>
import functools

import jax
import jax.numpy as jnp
from jax import lax
from jax.experimental import pallas as pl
from jax.experimental.pallas import tpu as pltpu


def _proden_kernel(
    idx_ref,      # (B,)        int32 scalar-prefetched sample indices (SMEM)
    ow_ref,       # (tB, Cp)    weak-aug logits tile   (VMEM, pipelined)
    os_ref,       # (tB, Cp)    strong-aug logits tile (VMEM, pipelined)
    conf_hbm,     # (N, Cp) f32 confidence table (HBM, memory_space=pl.ANY)
    loss_ref,     # (1, 1)  f32 resident loss accumulator
    conf_out,     # (N, Cp) f32 confidence output (HBM, aliased to conf_hbm)
    tgt_buf,      # (2, tB, Cp) f32 scratch: gathered target rows (double buffer)
    new_buf,      # (tB, Cp)    f32 scratch: revised target rows (scatter source)
    gsem,         # DMA semaphore: gathers
    ssem,         # DMA semaphore: scatters
    *,
    update_target: bool,
    unroll: int,
):
    i = pl.program_id(0)
    n_tiles = pl.num_programs(0)
    tb, _ = ow_ref.shape
    inv_b = 1.0 / idx_ref.shape[0]
    slot = i % 2

    # ---- row-gather helpers (single semaphore, aggregated wait) ---------------
    def issue_gathers(tile, slot_):
        base = tile * tb

        def body(r, carry):
            row = idx_ref[base + r]
            pltpu.make_async_copy(
                conf_hbm.at[pl.ds(row, 1), :],
                tgt_buf.at[slot_, pl.ds(r, 1), :],
                gsem,
            ).start()
            return carry

        lax.fori_loop(0, tb, body, 0, unroll=unroll)

    def wait_gathers(slot_):
        # All tb row gathers signal `gsem`; one wait sized to the full (tB, Cp)
        # slab retires them all (total bytes match exactly).
        pltpu.make_async_copy(tgt_buf.at[slot_], tgt_buf.at[slot_], gsem).wait()

    def wait_scatters():
        pltpu.make_async_copy(new_buf, new_buf, ssem).wait()

    @pl.when(i == 0)
    def _():
        loss_ref[...] = jnp.zeros_like(loss_ref)
        issue_gathers(0, 0)          # prime the first tile's gather

    ow = ow_ref[...].astype(jnp.float32)
    osw = os_ref[...].astype(jnp.float32)

    # One exp pass per softmax; probs reuse exp(z) with a single log + one
    # (exact) reciprocal per row — revised targets are persisted, keep it exact.
    def softmax_pair(x):
        z = x - jnp.max(x, axis=1, keepdims=True)
        e = jnp.exp(z)
        s = jnp.sum(e, axis=1, keepdims=True)
        return e * pl.reciprocal(s), z - jnp.log(s)

    pw, log_pw = softmax_pair(ow)
    ps, log_ps = softmax_pair(osw)

    # Gather for this tile was issued at i==0 above, or prefetched during the
    # previous grid step; its latency hides behind the softmax work.
    wait_gathers(slot)

    @pl.when(i + 1 < n_tiles)
    def _():
        issue_gathers(i + 1, 1 - slot)   # cross-tile prefetch (P4)

    tgt = tgt_buf[slot]
    pos = tgt > 0.0

    # Complementary loss on non-candidate classes (padded columns: p=0 -> 0).
    # maximum(.,0) guards the one-ulp p>1 overshoot from reciprocal rounding.
    neg = (tgt == 0.0).astype(jnp.float32)
    om_w = jnp.maximum(1.0 - pw, 0.0)
    om_s = jnp.maximum(1.0 - ps, 0.0)
    sup = neg * (-jnp.log(om_w) - jnp.log(om_s))

    # Both batchmean KL terms fused into one masked pass:
    #   KL(log_pw, tgt) + KL(log_ps, tgt) = sum_{tgt>0} tgt*(2*log(tgt) - (log_pw+log_ps))
    log_tgt = jnp.log(jnp.where(pos, tgt, 1.0))
    kl = jnp.where(pos, tgt * (2.0 * log_tgt - (log_pw + log_ps)), 0.0)

    tile_loss = jnp.sum(sup + kl, axis=1, keepdims=True)    # lane reduce    (tB, 1)
    tile_loss = jnp.sum(tile_loss, axis=0, keepdims=True)   # sublane reduce (1, 1)
    loss_ref[...] += tile_loss * inv_b

    if update_target:
        # Revised target: sqrt((tgt>0)*ps * (tgt>0)*pw), row-normalized (exact div).
        mask = pos.astype(jnp.float32)
        r_y = jnp.sqrt(mask * ps * pw)
        denom = jnp.sum(r_y, axis=1, keepdims=True)
        denom = jnp.where(denom > 0.0, denom, 1.0)   # all-zero row -> 0 row, not NaN
        new_rows = r_y / denom

        # The previous tile's scatters still read new_buf — retire them only now,
        # so the writeback overlapped with this tile's softmax/gather work.
        @pl.when(i > 0)
        def _():
            wait_scatters()

        new_buf[...] = new_rows

        # Scatter revised rows straight back into the (aliased) confidence table.
        base = i * tb

        def body(r, carry):
            row = idx_ref[base + r]
            pltpu.make_async_copy(
                new_buf.at[pl.ds(r, 1), :],
                conf_out.at[pl.ds(row, 1), :],
                ssem,
            ).start()
            return carry

        lax.fori_loop(0, tb, body, 0, unroll=unroll)

        @pl.when(i == n_tiles - 1)
        def _():
            wait_scatters()            # drain: no DMA may outlive the kernel


def _pick_batch_tile(b, max_tile):
    """Largest divisor of b that is <= max_tile and a multiple of 8 (else b)."""
    for t in range(min(b, max_tile), 0, -1):
        if b % t == 0 and (t % 8 == 0 or t == b):
            return t
    return b


def _proden_loss_prior(confidence, output_w, output_s, index, update_target=True):
    b, c = output_w.shape
    n, c2 = confidence.shape
    assert c2 == c and output_s.shape == (b, c) and index.shape == (b,)

    # ---- lane-dense layout: pad the class dim up to a multiple of 128 ---------
    c_pad = ((c + 127) // 128) * 128
    if output_w.dtype not in (jnp.float32, jnp.bfloat16, jnp.float16):
        output_w = output_w.astype(jnp.float32)
    output_s = output_s.astype(output_w.dtype)      # stream logits in native dtype
    confidence = confidence.astype(jnp.float32)
    index = index.astype(jnp.int32)

    if c_pad != c:
        pad = ((0, 0), (0, c_pad - c))
        # -1e30 logits -> softmax prob exactly 0; 0 confidence -> every sup/kl/
        # revision term is exactly 0 in the padded columns.
        output_w = jnp.pad(output_w, pad, constant_values=-1e30)
        output_s = jnp.pad(output_s, pad, constant_values=-1e30)
        conf_p = jnp.pad(confidence, pad)
    else:
        conf_p = confidence

    # ---- tiling: biggest batch tile whose VMEM working set stays small --------
    itemsize = jnp.dtype(output_w.dtype).itemsize
    # 2 pipelined logit inputs x 2 buffers + 2-slot gather buf + scatter buf + slack
    row_bytes = c_pad * (4 * itemsize + 3 * 4 + 32)
    max_tile = max(8, min(1024, (12 * 1024 * 1024) // row_bytes))
    tb = _pick_batch_tile(b, max_tile)
    grid = (b // tb,)
    unroll = min(8, tb)

    grid_spec = pltpu.PrefetchScalarGridSpec(
        num_scalar_prefetch=1,
        grid=grid,
        in_specs=[
            pl.BlockSpec((tb, c_pad), lambda i, idx: (i, 0)),   # weak-aug logits tile
            pl.BlockSpec((tb, c_pad), lambda i, idx: (i, 0)),   # strong-aug logits tile
            pl.BlockSpec(memory_space=pl.ANY),                  # confidence table (HBM)
        ],
        out_specs=(
            pl.BlockSpec((1, 1), lambda i, idx: (0, 0)),        # resident loss accumulator
            pl.BlockSpec(memory_space=pl.ANY),                  # aliased confidence (HBM)
        ),
        scratch_shapes=[
            pltpu.VMEM((2, tb, c_pad), jnp.float32),            # gathered rows (dbl buf)
            pltpu.VMEM((tb, c_pad), jnp.float32),               # revised rows
            pltpu.SemaphoreType.DMA(()),                        # gather semaphore
            pltpu.SemaphoreType.DMA(()),                        # scatter semaphore
        ],
    )

    loss, new_conf = pl.pallas_call(
        functools.partial(_proden_kernel, update_target=update_target, unroll=unroll),
        grid_spec=grid_spec,
        out_shape=(
            jax.ShapeDtypeStruct((1, 1), jnp.float32),
            jax.ShapeDtypeStruct((n, c_pad), jnp.float32),
        ),
        # Call args are (index, ow, osw, conf): confidence (operand 3) aliases
        # output 1, so only the revised rows move; the rest of the table stays put.
        input_output_aliases={3: 1},
        compiler_params=pltpu.CompilerParams(
            # Sequential grid: carried loss accumulator + cross-tile DMA chains.
            # TODO(synk): per-tile partial losses + a "parallel" axis would unlock the
            # second TensorCore on v7x, at the cost of the cross-tile prefetch chain.
            dimension_semantics=("arbitrary",),
            vmem_limit_bytes=32 * 1024 * 1024,
        ),
    )(index, output_w, output_s, conf_p)

    if c_pad != c:
        new_conf = new_conf[:, :c]
    return loss[0, 0], new_conf


# Donating `confidence` lets XLA honor the in-kernel alias with a true in-place
# table update instead of a defensive copy of the whole (N, C) table.
proden_loss_prior = jax.jit(
    _proden_loss_prior,
    static_argnames=("update_target",),
    donate_argnums=(0,),
)


if __name__ == "__main__":
    key = jax.random.PRNGKey(0)
    k1, k2, k3, k4 = jax.random.split(key, 4)

    N, B, C = 32, 8, 16   # dataset rows, batch, num classes

    # Deterministic synthetic confidence table: random partial-label masks,
    # row-normalized (as a PLL confidence matrix would be).
    raw_mask = (jax.random.uniform(k1, (N, C)) < 0.4).astype(jnp.float32)
    raw_mask = raw_mask.at[:, 0].set(1.0)     # at least one candidate label per row
    confidence = raw_mask / jnp.sum(raw_mask, axis=1, keepdims=True)

    output_w = jax.random.normal(k2, (B, C), dtype=jnp.float32)
    output_s = jax.random.normal(k3, (B, C), dtype=jnp.float32)
    index = jax.random.permutation(k4, N)[:B].astype(jnp.int32)

    loss, confidence = proden_loss_prior(
        confidence, output_w, output_s, index, update_target=True
    )
    jax.block_until_ready((loss, confidence))
    print("KERNEL_OK")
</pallas_src>

<mosaic_0001>
module attributes {stable_mosaic.version = 11 : i64} {
  func.func @_proden_kernel(%arg0: i32, %arg1: memref<8xi32, #tpu.memory_space<smem>>, %arg2: memref<8x128xf32, #tpu.memory_space<vmem>>, %arg3: memref<8x128xf32, #tpu.memory_space<vmem>>, %arg4: memref<32x128xf32, #tpu.memory_space<any>>, %arg5: memref<1x1xf32, #tpu.memory_space<vmem>>, %arg6: memref<32x128xf32, #tpu.memory_space<any>>, %arg7: memref<2x8x128xf32, #tpu.memory_space<vmem>>, %arg8: memref<8x128xf32, #tpu.memory_space<vmem>>, %arg9: memref<!tpu.dma_semaphore, #tpu.memory_space<semaphore_mem>>, %arg10: memref<!tpu.dma_semaphore, #tpu.memory_space<semaphore_mem>>) attributes {dimension_semantics = [#tpu.dimension_semantics<arbitrary>], iteration_bounds = array<i64: 1>, scalar_prefetch = 1 : i64, scratch_operands = 4 : i64, tpu.core_type = #tpu.core_type<tc>, window_params = [{transform_indices = @transform_0, window_bounds = array<i64: 8, 128>}, {transform_indices = @transform_1, window_bounds = array<i64: 8, 128>}, {}, {pipeline_mode = #tpu.pipeline_mode<synchronous>, transform_indices = @transform_3, window_bounds = array<i64: 1, 1>}, {}]} {
    %c2_i32 = arith.constant 2 : i32
    %c0_i32 = arith.constant 0 : i32
    %0 = arith.cmpi eq, %c2_i32, %c0_i32 : i32
    %c1_i32 = arith.constant 1 : i32
    %1 = arith.select %0, %c1_i32, %c2_i32 : i32
    %2 = arith.remsi %arg0, %1 : i32
    %c0_i32_0 = arith.constant 0 : i32
    %3 = arith.cmpi ne, %2, %c0_i32_0 : i32
    %c0_i32_1 = arith.constant 0 : i32
    %4 = arith.cmpi slt, %2, %c0_i32_1 : i32
    %c0_i32_2 = arith.constant 0 : i32
    %5 = arith.cmpi slt, %1, %c0_i32_2 : i32
    %6 = arith.xori %4, %5 : i1
    %7 = arith.andi %6, %3 : i1
    %8 = arith.addi %2, %1 : i32
    %9 = arith.select %7, %8, %2 : i32
    %c0_i32_3 = arith.constant 0 : i32
    %10 = arith.cmpi eq, %arg0, %c0_i32_3 : i32
    %11 = arith.extui %10 : i1 to i32
    %c0_i32_4 = arith.constant 0 : i32
    %12 = arith.cmpi ne, %11, %c0_i32_4 : i32
    scf.if %12 {
      %cst_66 = arith.constant 0.000000e+00 : f32
      %153 = vector.broadcast %cst_66 : f32 to vector<1x1xf32>
      %c0_67 = arith.constant 0 : index
      %c0_68 = arith.constant 0 : index
      %154 = vector.load %arg5[%c0_67, %c0_68] : memref<1x1xf32, #tpu.memory_space<vmem>>, vector<1x1xf32>
      tpu.vector_store %arg5[%c0_67, %c0_68], %153 {strides = array<i32>} : memref<1x1xf32, #tpu.memory_space<vmem>>, vector<1x1xf32>,
      %c0_i32_69 = arith.constant 0 : i32
      %c0_i32_70 = arith.constant 0 : i32
      %155 = arith.addi %c0_i32_70, %c0_i32_69 : i32
      %156 = arith.index_cast %155 : i32 to index
      %157 = memref.load %arg1[%156] : memref<8xi32, #tpu.memory_space<smem>>
      %c0_i32_71 = arith.constant 0 : i32
      %c0_i32_72 = arith.constant 0 : i32
      %158 = tpu.memref_slice %arg4[%157, %c0_i32_72] : memref<32x128xf32, #tpu.memory_space<any>> -> memref<1x128xf32, #tpu.memory_space<any>>
      %c0_i32_73 = arith.constant 0 : i32
      %159 = tpu.memref_slice %arg7[%c0_i32_71, %c0_i32_69, %c0_i32_73] : memref<2x8x128xf32, #tpu.memory_space<vmem>> -> memref<1x1x128xf32, #tpu.memory_space<vmem>>
      %160 = tpu.memref_squeeze %159 : memref<1x1x128xf32, #tpu.memory_space<vmem>> -> memref<1x128xf32, #tpu.memory_space<vmem>>
      tpu.enqueue_dma source(%158 : memref<1x128xf32, #tpu.memory_space<any>>) target(%160 : memref<1x128xf32, #tpu.memory_space<vmem>>) target_semaphore(%arg9 : memref<!tpu.dma_semaphore, #tpu.memory_space<semaphore_mem>>)
      %c1_i32_74 = arith.constant 1 : i32
      %c0_i32_75 = arith.constant 0 : i32
      %161 = arith.addi %c0_i32_75, %c1_i32_74 : i32
      %162 = arith.index_cast %161 : i32 to index
      %163 = memref.load %arg1[%162] : memref<8xi32, #tpu.memory_space<smem>>
      %c0_i32_76 = arith.constant 0 : i32
      %c0_i32_77 = arith.constant 0 : i32
      %164 = tpu.memref_slice %arg4[%163, %c0_i32_77] : memref<32x128xf32, #tpu.memory_space<any>> -> memref<1x128xf32, #tpu.memory_space<any>>
      %c0_i32_78 = arith.constant 0 : i32
      %165 = tpu.memref_slice %arg7[%c0_i32_76, %c1_i32_74, %c0_i32_78] : memref<2x8x128xf32, #tpu.memory_space<vmem>> -> memref<1x1x128xf32, #tpu.memory_space<vmem>>
      %166 = tpu.memref_squeeze %165 : memref<1x1x128xf32, #tpu.memory_space<vmem>> -> memref<1x128xf32, #tpu.memory_space<vmem>>
      tpu.enqueue_dma source(%164 : memref<1x128xf32, #tpu.memory_space<any>>) target(%166 : memref<1x128xf32, #tpu.memory_space<vmem>>) target_semaphore(%arg9 : memref<!tpu.dma_semaphore, #tpu.memory_space<semaphore_mem>>)
      %c2_i32_79 = arith.constant 2 : i32
      %c0_i32_80 = arith.constant 0 : i32
      %167 = arith.addi %c0_i32_80, %c2_i32_79 : i32
      %168 = arith.index_cast %167 : i32 to index
      %169 = memref.load %arg1[%168] : memref<8xi32, #tpu.memory_space<smem>>
      %c0_i32_81 = arith.constant 0 : i32
      %c0_i32_82 = arith.constant 0 : i32
      %170 = tpu.memref_slice %arg4[%169, %c0_i32_82] : memref<32x128xf32, #tpu.memory_space<any>> -> memref<1x128xf32, #tpu.memory_space<any>>
      %c0_i32_83 = arith.constant 0 : i32
      %171 = tpu.memref_slice %arg7[%c0_i32_81, %c2_i32_79, %c0_i32_83] : memref<2x8x128xf32, #tpu.memory_space<vmem>> -> memref<1x1x128xf32, #tpu.memory_space<vmem>>
      %172 = tpu.memref_squeeze %171 : memref<1x1x128xf32, #tpu.memory_space<vmem>> -> memref<1x128xf32, #tpu.memory_space<vmem>>
      tpu.enqueue_dma source(%170 : memref<1x128xf32, #tpu.memory_space<any>>) target(%172 : memref<1x128xf32, #tpu.memory_space<vmem>>) target_semaphore(%arg9 : memref<!tpu.dma_semaphore, #tpu.memory_space<semaphore_mem>>)
      %c3_i32_84 = arith.constant 3 : i32
      %c0_i32_85 = arith.constant 0 : i32
      %173 = arith.addi %c0_i32_85, %c3_i32_84 : i32
      %174 = arith.index_cast %173 : i32 to index
      %175 = memref.load %arg1[%174] : memref<8xi32, #tpu.memory_space<smem>>
      %c0_i32_86 = arith.constant 0 : i32
      %c0_i32_87 = arith.constant 0 : i32
      %176 = tpu.memref_slice %arg4[%175, %c0_i32_87] : memref<32x128xf32, #tpu.memory_space<any>> -> memref<1x128xf32, #tpu.memory_space<any>>
      %c0_i32_88 = arith.constant 0 : i32
      %177 = tpu.memref_slice %arg7[%c0_i32_86, %c3_i32_84, %c0_i32_88] : memref<2x8x128xf32, #tpu.memory_space<vmem>> -> memref<1x1x128xf32, #tpu.memory_space<vmem>>
      %178 = tpu.memref_squeeze %177 : memref<1x1x128xf32, #tpu.memory_space<vmem>> -> memref<1x128xf32, #tpu.memory_space<vmem>>
      tpu.enqueue_dma source(%176 : memref<1x128xf32, #tpu.memory_space<any>>) target(%178 : memref<1x128xf32, #tpu.memory_space<vmem>>) target_semaphore(%arg9 : memref<!tpu.dma_semaphore, #tpu.memory_space<semaphore_mem>>)
      %c4_i32_89 = arith.constant 4 : i32
      %c0_i32_90 = arith.constant 0 : i32
      %179 = arith.addi %c0_i32_90, %c4_i32_89 : i32
      %180 = arith.index_cast %179 : i32 to index
      %181 = memref.load %arg1[%180] : memref<8xi32, #tpu.memory_space<smem>>
      %c0_i32_91 = arith.constant 0 : i32
      %c0_i32_92 = arith.constant 0 : i32
      %182 = tpu.memref_slice %arg4[%181, %c0_i32_92] : memref<32x128xf32, #tpu.memory_space<any>> -> memref<1x128xf32, #tpu.memory_space<any>>
      %c0_i32_93 = arith.constant 0 : i32
      %183 = tpu.memref_slice %arg7[%c0_i32_91, %c4_i32_89, %c0_i32_93] : memref<2x8x128xf32, #tpu.memory_space<vmem>> -> memref<1x1x128xf32, #tpu.memory_space<vmem>>
      %184 = tpu.memref_squeeze %183 : memref<1x1x128xf32, #tpu.memory_space<vmem>> -> memref<1x128xf32, #tpu.memory_space<vmem>>
      tpu.enqueue_dma source(%182 : memref<1x128xf32, #tpu.memory_space<any>>) target(%184 : memref<1x128xf32, #tpu.memory_space<vmem>>) target_semaphore(%arg9 : memref<!tpu.dma_semaphore, #tpu.memory_space<semaphore_mem>>)
      %c5_i32_94 = arith.constant 5 : i32
      %c0_i32_95 = arith.constant 0 : i32
      %185 = arith.addi %c0_i32_95, %c5_i32_94 : i32
      %186 = arith.index_cast %185 : i32 to index
      %187 = memref.load %arg1[%186] : memref<8xi32, #tpu.memory_space<smem>>
      %c0_i32_96 = arith.constant 0 : i32
      %c0_i32_97 = arith.constant 0 : i32
      %188 = tpu.memref_slice %arg4[%187, %c0_i32_97] : memref<32x128xf32, #tpu.memory_space<any>> -> memref<1x128xf32, #tpu.memory_space<any>>
      %c0_i32_98 = arith.constant 0 : i32
      %189 = tpu.memref_slice %arg7[%c0_i32_96, %c5_i32_94, %c0_i32_98] : memref<2x8x128xf32, #tpu.memory_space<vmem>> -> memref<1x1x128xf32, #tpu.memory_space<vmem>>
      %190 = tpu.memref_squeeze %189 : memref<1x1x128xf32, #tpu.memory_space<vmem>> -> memref<1x128xf32, #tpu.memory_space<vmem>>
      tpu.enqueue_dma source(%188 : memref<1x128xf32, #tpu.memory_space<any>>) target(%190 : memref<1x128xf32, #tpu.memory_space<vmem>>) target_semaphore(%arg9 : memref<!tpu.dma_semaphore, #tpu.memory_space<semaphore_mem>>)
      %c6_i32_99 = arith.constant 6 : i32
      %c0_i32_100 = arith.constant 0 : i32
      %191 = arith.addi %c0_i32_100, %c6_i32_99 : i32
      %192 = arith.index_cast %191 : i32 to index
      %193 = memref.load %arg1[%192] : memref<8xi32, #tpu.memory_space<smem>>
      %c0_i32_101 = arith.constant 0 : i32
      %c0_i32_102 = arith.constant 0 : i32
      %194 = tpu.memref_slice %arg4[%193, %c0_i32_102] : memref<32x128xf32, #tpu.memory_space<any>> -> memref<1x128xf32, #tpu.memory_space<any>>
      %c0_i32_103 = arith.constant 0 : i32
      %195 = tpu.memref_slice %arg7[%c0_i32_101, %c6_i32_99, %c0_i32_103] : memref<2x8x128xf32, #tpu.memory_space<vmem>> -> memref<1x1x128xf32, #tpu.memory_space<vmem>>
      %196 = tpu.memref_squeeze %195 : memref<1x1x128xf32, #tpu.memory_space<vmem>> -> memref<1x128xf32, #tpu.memory_space<vmem>>
      tpu.enqueue_dma source(%194 : memref<1x128xf32, #tpu.memory_space<any>>) target(%196 : memref<1x128xf32, #tpu.memory_space<vmem>>) target_semaphore(%arg9 : memref<!tpu.dma_semaphore, #tpu.memory_space<semaphore_mem>>)
      %c7_i32_104 = arith.constant 7 : i32
      %c0_i32_105 = arith.constant 0 : i32
      %197 = arith.addi %c0_i32_105, %c7_i32_104 : i32
      %198 = arith.index_cast %197 : i32 to index
      %199 = memref.load %arg1[%198] : memref<8xi32, #tpu.memory_space<smem>>
      %c0_i32_106 = arith.constant 0 : i32
      %c0_i32_107 = arith.constant 0 : i32
      %200 = tpu.memref_slice %arg4[%199, %c0_i32_107] : memref<32x128xf32, #tpu.memory_space<any>> -> memref<1x128xf32, #tpu.memory_space<any>>
      %c0_i32_108 = arith.constant 0 : i32
      %201 = tpu.memref_slice %arg7[%c0_i32_106, %c7_i32_104, %c0_i32_108] : memref<2x8x128xf32, #tpu.memory_space<vmem>> -> memref<1x1x128xf32, #tpu.memory_space<vmem>>
      %202 = tpu.memref_squeeze %201 : memref<1x1x128xf32, #tpu.memory_space<vmem>> -> memref<1x128xf32, #tpu.memory_space<vmem>>
      tpu.enqueue_dma source(%200 : memref<1x128xf32, #tpu.memory_space<any>>) target(%202 : memref<1x128xf32, #tpu.memory_space<vmem>>) target_semaphore(%arg9 : memref<!tpu.dma_semaphore, #tpu.memory_space<semaphore_mem>>)
      %c8_i32_109 = arith.constant 8 : i32
    } else {
    }
    %c0 = arith.constant 0 : index
    %c0_5 = arith.constant 0 : index
    %13 = vector.load %arg2[%c0, %c0_5] : memref<8x128xf32, #tpu.memory_space<vmem>>, vector<8x128xf32>
    %c0_6 = arith.constant 0 : index
    %c0_7 = arith.constant 0 : index
    %14 = vector.load %arg3[%c0_6, %c0_7] : memref<8x128xf32, #tpu.memory_space<vmem>>, vector<8x128xf32>
    %cst = arith.constant dense<0xFF800000> : vector<8xf32>
    %15 = vector.multi_reduction <maximumf>, %13, %cst [1] : vector<8x128xf32> to vector<8xf32>
    %16 = vector.shape_cast %15 : vector<8xf32> to vector<8x1xf32>
    %17 = vector.broadcast %16 : vector<8x1xf32> to vector<8x128xf32>
    %18 = arith.subf %13, %17 : vector<8x128xf32>
    %19 = math.exp %18 : vector<8x128xf32>
    %cst_8 = arith.constant dense<0.000000e+00> : vector<8xf32>
    %20 = vector.multi_reduction <add>, %19, %cst_8 [1] : vector<8x128xf32> to vector<8xf32>
    %21 = vector.shape_cast %20 : vector<8xf32> to vector<8x1xf32>
    %22 = tpu.reciprocal %21 : vector<8x1xf32> -> vector<8x1xf32>
    %23 = vector.broadcast %22 : vector<8x1xf32> to vector<8x128xf32>
    %24 = arith.mulf %19, %23 : vector<8x128xf32>
    %25 = math.log %21 : vector<8x1xf32>
    %26 = vector.broadcast %25 : vector<8x1xf32> to vector<8x128xf32>
    %27 = arith.subf %18, %26 : vector<8x128xf32>
    %cst_9 = arith.constant dense<0xFF800000> : vector<8xf32>
    %28 = vector.multi_reduction <maximumf>, %14, %cst_9 [1] : vector<8x128xf32> to vector<8xf32>
    %29 = vector.shape_cast %28 : vector<8xf32> to vector<8x1xf32>
    %30 = vector.broadcast %29 : vector<8x1xf32> to vector<8x128xf32>
    %31 = arith.subf %14, %30 : vector<8x128xf32>
    %32 = math.exp %31 : vector<8x128xf32>
    %cst_10 = arith.constant dense<0.000000e+00> : vector<8xf32>
    %33 = vector.multi_reduction <add>, %32, %cst_10 [1] : vector<8x128xf32> to vector<8xf32>
    %34 = vector.shape_cast %33 : vector<8xf32> to vector<8x1xf32>
    %35 = tpu.reciprocal %34 : vector<8x1xf32> -> vector<8x1xf32>
    %36 = vector.broadcast %35 : vector<8x1xf32> to vector<8x128xf32>
    %37 = arith.mulf %32, %36 : vector<8x128xf32>
    %38 = math.log %34 : vector<8x1xf32>
    %39 = vector.broadcast %38 : vector<8x1xf32> to vector<8x128xf32>
    %40 = arith.subf %31, %39 : vector<8x128xf32>
    %c0_i32_11 = arith.constant 0 : i32
    %c0_i32_12 = arith.constant 0 : i32
    %41 = tpu.memref_slice %arg7[%9, %c0_i32_11, %c0_i32_12] : memref<2x8x128xf32, #tpu.memory_space<vmem>> -> memref<1x8x128xf32, #tpu.memory_space<vmem>>
    %42 = tpu.memref_squeeze %41 : memref<1x8x128xf32, #tpu.memory_space<vmem>> -> memref<8x128xf32, #tpu.memory_space<vmem>>
    %c0_i32_13 = arith.constant 0 : i32
    %c0_i32_14 = arith.constant 0 : i32
    %43 = tpu.memref_slice %arg7[%9, %c0_i32_13, %c0_i32_14] : memref<2x8x128xf32, #tpu.memory_space<vmem>> -> memref<1x8x128xf32, #tpu.memory_space<vmem>>
    %44 = tpu.memref_squeeze %43 : memref<1x8x128xf32, #tpu.memory_space<vmem>> -> memref<8x128xf32, #tpu.memory_space<vmem>>
    tpu.wait_dma2 semaphore(%arg9 : memref<!tpu.dma_semaphore, #tpu.memory_space<semaphore_mem>>) src(%42 : memref<8x128xf32, #tpu.memory_space<vmem>>) dst(%44 : memref<8x128xf32, #tpu.memory_space<vmem>>)
    %c1_i32_15 = arith.constant 1 : i32
    %45 = arith.addi %arg0, %c1_i32_15 : i32
    %c1_i32_16 = arith.constant 1 : i32
    %46 = arith.cmpi slt, %45, %c1_i32_16 : i32
    %47 = arith.extui %46 : i1 to i32
    %c0_i32_17 = arith.constant 0 : i32
    %48 = arith.cmpi ne, %47, %c0_i32_17 : i32
    scf.if %48 {
      %c1_i32_66 = arith.constant 1 : i32
      %153 = arith.addi %arg0, %c1_i32_66 : i32
      %c1_i32_67 = arith.constant 1 : i32
      %154 = arith.subi %c1_i32_67, %9 : i32
      %c8_i32_68 = arith.constant 8 : i32
      %155 = arith.muli %153, %c8_i32_68 : i32
      %c0_i32_69 = arith.constant 0 : i32
      %156 = arith.addi %155, %c0_i32_69 : i32
      %157 = arith.index_cast %156 : i32 to index
      %158 = memref.load %arg1[%157] : memref<8xi32, #tpu.memory_space<smem>>
      %c0_i32_70 = arith.constant 0 : i32
      %159 = tpu.memref_slice %arg4[%158, %c0_i32_70] : memref<32x128xf32, #tpu.memory_space<any>> -> memref<1x128xf32, #tpu.memory_space<any>>
      %c0_i32_71 = arith.constant 0 : i32
      %160 = tpu.memref_slice %arg7[%154, %c0_i32_69, %c0_i32_71] : memref<2x8x128xf32, #tpu.memory_space<vmem>> -> memref<1x1x128xf32, #tpu.memory_space<vmem>>
      %161 = tpu.memref_squeeze %160 : memref<1x1x128xf32, #tpu.memory_space<vmem>> -> memref<1x128xf32, #tpu.memory_space<vmem>>
      tpu.enqueue_dma source(%159 : memref<1x128xf32, #tpu.memory_space<any>>) target(%161 : memref<1x128xf32, #tpu.memory_space<vmem>>) target_semaphore(%arg9 : memref<!tpu.dma_semaphore, #tpu.memory_space<semaphore_mem>>)
      %c1_i32_72 = arith.constant 1 : i32
      %162 = arith.addi %155, %c1_i32_72 : i32
      %163 = arith.index_cast %162 : i32 to index
      %164 = memref.load %arg1[%163] : memref<8xi32, #tpu.memory_space<smem>>
      %c0_i32_73 = arith.constant 0 : i32
      %165 = tpu.memref_slice %arg4[%164, %c0_i32_73] : memref<32x128xf32, #tpu.memory_space<any>> -> memref<1x128xf32, #tpu.memory_space<any>>
      %c0_i32_74 = arith.constant 0 : i32
      %166 = tpu.memref_slice %arg7[%154, %c1_i32_72, %c0_i32_74] : memref<2x8x128xf32, #tpu.memory_space<vmem>> -> memref<1x1x128xf32, #tpu.memory_space<vmem>>
      %167 = tpu.memref_squeeze %166 : memref<1x1x128xf32, #tpu.memory_space<vmem>> -> memref<1x128xf32, #tpu.memory_space<vmem>>
      tpu.enqueue_dma source(%165 : memref<1x128xf32, #tpu.memory_space<any>>) target(%167 : memref<1x128xf32, #tpu.memory_space<vmem>>) target_semaphore(%arg9 : memref<!tpu.dma_semaphore, #tpu.memory_space<semaphore_mem>>)
      %c2_i32_75 = arith.constant 2 : i32
      %168 = arith.addi %155, %c2_i32_75 : i32
      %169 = arith.index_cast %168 : i32 to index
      %170 = memref.load %arg1[%169] : memref<8xi32, #tpu.memory_space<smem>>
      %c0_i32_76 = arith.constant 0 : i32
      %171 = tpu.memref_slice %arg4[%170, %c0_i32_76] : memref<32x128xf32, #tpu.memory_space<any>> -> memref<1x128xf32, #tpu.memory_space<any>>
      %c0_i32_77 = arith.constant 0 : i32
      %172 = tpu.memref_slice %arg7[%154, %c2_i32_75, %c0_i32_77] : memref<2x8x128xf32, #tpu.memory_space<vmem>> -> memref<1x1x128xf32, #tpu.memory_space<vmem>>
      %173 = tpu.memref_squeeze %172 : memref<1x1x128xf32, #tpu.memory_space<vmem>> -> memref<1x128xf32, #tpu.memory_space<vmem>>
      tpu.enqueue_dma source(%171 : memref<1x128xf32, #tpu.memory_space<any>>) target(%173 : memref<1x128xf32, #tpu.memory_space<vmem>>) target_semaphore(%arg9 : memref<!tpu.dma_semaphore, #tpu.memory_space<semaphore_mem>>)
      %c3_i32_78 = arith.constant 3 : i32
      %174 = arith.addi %155, %c3_i32_78 : i32
      %175 = arith.index_cast %174 : i32 to index
      %176 = memref.load %arg1[%175] : memref<8xi32, #tpu.memory_space<smem>>
      %c0_i32_79 = arith.constant 0 : i32
      %177 = tpu.memref_slice %arg4[%176, %c0_i32_79] : memref<32x128xf32, #tpu.memory_space<any>> -> memref<1x128xf32, #tpu.memory_space<any>>
      %c0_i32_80 = arith.constant 0 : i32
      %178 = tpu.memref_slice %arg7[%154, %c3_i32_78, %c0_i32_80] : memref<2x8x128xf32, #tpu.memory_space<vmem>> -> memref<1x1x128xf32, #tpu.memory_space<vmem>>
      %179 = tpu.memref_squeeze %178 : memref<1x1x128xf32, #tpu.memory_space<vmem>> -> memref<1x128xf32, #tpu.memory_space<vmem>>
      tpu.enqueue_dma source(%177 : memref<1x128xf32, #tpu.memory_space<any>>) target(%179 : memref<1x128xf32, #tpu.memory_space<vmem>>) target_semaphore(%arg9 : memref<!tpu.dma_semaphore, #tpu.memory_space<semaphore_mem>>)
      %c4_i32_81 = arith.constant 4 : i32
      %180 = arith.addi %155, %c4_i32_81 : i32
      %181 = arith.index_cast %180 : i32 to index
      %182 = memref.load %arg1[%181] : memref<8xi32, #tpu.memory_space<smem>>
      %c0_i32_82 = arith.constant 0 : i32
      %183 = tpu.memref_slice %arg4[%182, %c0_i32_82] : memref<32x128xf32, #tpu.memory_space<any>> -> memref<1x128xf32, #tpu.memory_space<any>>
      %c0_i32_83 = arith.constant 0 : i32
      %184 = tpu.memref_slice %arg7[%154, %c4_i32_81, %c0_i32_83] : memref<2x8x128xf32, #tpu.memory_space<vmem>> -> memref<1x1x128xf32, #tpu.memory_space<vmem>>
      %185 = tpu.memref_squeeze %184 : memref<1x1x128xf32, #tpu.memory_space<vmem>> -> memref<1x128xf32, #tpu.memory_space<vmem>>
      tpu.enqueue_dma source(%183 : memref<1x128xf32, #tpu.memory_space<any>>) target(%185 : memref<1x128xf32, #tpu.memory_space<vmem>>) target_semaphore(%arg9 : memref<!tpu.dma_semaphore, #tpu.memory_space<semaphore_mem>>)
      %c5_i32_84 = arith.constant 5 : i32
      %186 = arith.addi %155, %c5_i32_84 : i32
      %187 = arith.index_cast %186 : i32 to index
      %188 = memref.load %arg1[%187] : memref<8xi32, #tpu.memory_space<smem>>
      %c0_i32_85 = arith.constant 0 : i32
      %189 = tpu.memref_slice %arg4[%188, %c0_i32_85] : memref<32x128xf32, #tpu.memory_space<any>> -> memref<1x128xf32, #tpu.memory_space<any>>
      %c0_i32_86 = arith.constant 0 : i32
      %190 = tpu.memref_slice %arg7[%154, %c5_i32_84, %c0_i32_86] : memref<2x8x128xf32, #tpu.memory_space<vmem>> -> memref<1x1x128xf32, #tpu.memory_space<vmem>>
      %191 = tpu.memref_squeeze %190 : memref<1x1x128xf32, #tpu.memory_space<vmem>> -> memref<1x128xf32, #tpu.memory_space<vmem>>
      tpu.enqueue_dma source(%189 : memref<1x128xf32, #tpu.memory_space<any>>) target(%191 : memref<1x128xf32, #tpu.memory_space<vmem>>) target_semaphore(%arg9 : memref<!tpu.dma_semaphore, #tpu.memory_space<semaphore_mem>>)
      %c6_i32_87 = arith.constant 6 : i32
      %192 = arith.addi %155, %c6_i32_87 : i32
      %193 = arith.index_cast %192 : i32 to index
      %194 = memref.load %arg1[%193] : memref<8xi32, #tpu.memory_space<smem>>
      %c0_i32_88 = arith.constant 0 : i32
      %195 = tpu.memref_slice %arg4[%194, %c0_i32_88] : memref<32x128xf32, #tpu.memory_space<any>> -> memref<1x128xf32, #tpu.memory_space<any>>
      %c0_i32_89 = arith.constant 0 : i32
      %196 = tpu.memref_slice %arg7[%154, %c6_i32_87, %c0_i32_89] : memref<2x8x128xf32, #tpu.memory_space<vmem>> -> memref<1x1x128xf32, #tpu.memory_space<vmem>>
      %197 = tpu.memref_squeeze %196 : memref<1x1x128xf32, #tpu.memory_space<vmem>> -> memref<1x128xf32, #tpu.memory_space<vmem>>
      tpu.enqueue_dma source(%195 : memref<1x128xf32, #tpu.memory_space<any>>) target(%197 : memref<1x128xf32, #tpu.memory_space<vmem>>) target_semaphore(%arg9 : memref<!tpu.dma_semaphore, #tpu.memory_space<semaphore_mem>>)
      %c7_i32_90 = arith.constant 7 : i32
      %198 = arith.addi %155, %c7_i32_90 : i32
      %199 = arith.index_cast %198 : i32 to index
      %200 = memref.load %arg1[%199] : memref<8xi32, #tpu.memory_space<smem>>
      %c0_i32_91 = arith.constant 0 : i32
      %201 = tpu.memref_slice %arg4[%200, %c0_i32_91] : memref<32x128xf32, #tpu.memory_space<any>> -> memref<1x128xf32, #tpu.memory_space<any>>
      %c0_i32_92 = arith.constant 0 : i32
      %202 = tpu.memref_slice %arg7[%154, %c7_i32_90, %c0_i32_92] : memref<2x8x128xf32, #tpu.memory_space<vmem>> -> memref<1x1x128xf32, #tpu.memory_space<vmem>>
      %203 = tpu.memref_squeeze %202 : memref<1x1x128xf32, #tpu.memory_space<vmem>> -> memref<1x128xf32, #tpu.memory_space<vmem>>
      tpu.enqueue_dma source(%201 : memref<1x128xf32, #tpu.memory_space<any>>) target(%203 : memref<1x128xf32, #tpu.memory_space<vmem>>) target_semaphore(%arg9 : memref<!tpu.dma_semaphore, #tpu.memory_space<semaphore_mem>>)
      %c8_i32_93 = arith.constant 8 : i32
    } else {
    }
    %49 = arith.index_cast %9 : i32 to index
    %c0_18 = arith.constant 0 : index
    %c0_19 = arith.constant 0 : index
    %50 = vector.load %arg7[%49, %c0_18, %c0_19] : memref<2x8x128xf32, #tpu.memory_space<vmem>>, vector<1x8x128xf32>
    %51 = vector.shape_cast %50 : vector<1x8x128xf32> to vector<8x128xf32>
    %cst_20 = arith.constant 0.000000e+00 : f32
    %52 = vector.broadcast %cst_20 : f32 to vector<8x128xf32>
    %53 = arith.cmpf ogt, %51, %52 : vector<8x128xf32>
    %cst_21 = arith.constant 0.000000e+00 : f32
    %54 = vector.broadcast %cst_21 : f32 to vector<8x128xf32>
    %55 = arith.cmpf oeq, %51, %54 : vector<8x128xf32>
    %56 = arith.extui %55 : vector<8x128xi1> to vector<8x128xi32>
    %57 = arith.sitofp %56 : vector<8x128xi32> to vector<8x128xf32>
    %cst_22 = arith.constant 1.000000e+00 : f32
    %58 = vector.broadcast %cst_22 : f32 to vector<8x128xf32>
    %59 = arith.subf %58, %24 : vector<8x128xf32>
    %cst_23 = arith.constant 0.000000e+00 : f32
    %60 = vector.broadcast %cst_23 : f32 to vector<8x128xf32>
    %61 = arith.maximumf %59, %60 : vector<8x128xf32>
    %cst_24 = arith.constant 1.000000e+00 : f32
    %62 = vector.broadcast %cst_24 : f32 to vector<8x128xf32>
    %63 = arith.subf %62, %37 : vector<8x128xf32>
    %cst_25 = arith.constant 0.000000e+00 : f32
    %64 = vector.broadcast %cst_25 : f32 to vector<8x128xf32>
    %65 = arith.maximumf %63, %64 : vector<8x128xf32>
    %66 = math.log %61 : vector<8x128xf32>
    %cst_26 = arith.constant 0.000000e+00 : f32
    %67 = vector.broadcast %cst_26 : f32 to vector<8x128xf32>
    %68 = arith.subf %67, %66 : vector<8x128xf32>
    %69 = math.log %65 : vector<8x128xf32>
    %70 = arith.subf %68, %69 : vector<8x128xf32>
    %71 = arith.mulf %57, %70 : vector<8x128xf32>
    %cst_27 = arith.constant 1.000000e+00 : f32
    %72 = vector.broadcast %cst_27 : f32 to vector<8x128xf32>
    %73 = arith.select %53, %51, %72 : vector<8x128xi1>, vector<8x128xf32>
    %74 = math.log %73 : vector<8x128xf32>
    %cst_28 = arith.constant 2.000000e+00 : f32
    %75 = vector.broadcast %cst_28 : f32 to vector<8x128xf32>
    %76 = arith.mulf %75, %74 : vector<8x128xf32>
    %77 = arith.addf %27, %40 : vector<8x128xf32>
    %78 = arith.subf %76, %77 : vector<8x128xf32>
    %79 = arith.mulf %51, %78 : vector<8x128xf32>
    %cst_29 = arith.constant 0.000000e+00 : f32
    %80 = vector.broadcast %cst_29 : f32 to vector<8x128xf32>
    %81 = arith.select %53, %79, %80 : vector<8x128xi1>, vector<8x128xf32>
    %82 = arith.addf %71, %81 : vector<8x128xf32>
    %cst_30 = arith.constant dense<0.000000e+00> : vector<8xf32>
    %83 = vector.multi_reduction <add>, %82, %cst_30 [1] : vector<8x128xf32> to vector<8xf32>
    %84 = vector.shape_cast %83 : vector<8xf32> to vector<8x1xf32>
    %cst_31 = arith.constant dense<0.000000e+00> : vector<1xf32>
    %85 = vector.multi_reduction <add>, %84, %cst_31 [0] : vector<8x1xf32> to vector<1xf32>
    %86 = vector.shape_cast %85 : vector<1xf32> to vector<1x1xf32>
    %c0_32 = arith.constant 0 : index
    %c0_33 = arith.constant 0 : index
    %87 = vector.load %arg5[%c0_32, %c0_33] : memref<1x1xf32, #tpu.memory_space<vmem>>, vector<1x1xf32>
    %cst_34 = arith.constant 1.250000e-01 : f32
    %88 = vector.broadcast %cst_34 : f32 to vector<1x1xf32>
    %89 = arith.mulf %86, %88 : vector<1x1xf32>
    %90 = arith.addf %87, %89 : vector<1x1xf32>
    %c0_35 = arith.constant 0 : index
    %c0_36 = arith.constant 0 : index
    %91 = vector.load %arg5[%c0_35, %c0_36] : memref<1x1xf32, #tpu.memory_space<vmem>>, vector<1x1xf32>
    tpu.vector_store %arg5[%c0_35, %c0_36], %90 {strides = array<i32>} : memref<1x1xf32, #tpu.memory_space<vmem>>, vector<1x1xf32>,
    %92 = arith.extui %53 : vector<8x128xi1> to vector<8x128xi32>
    %93 = arith.sitofp %92 : vector<8x128xi32> to vector<8x128xf32>
    %94 = arith.mulf %93, %37 : vector<8x128xf32>
    %95 = arith.mulf %94, %24 : vector<8x128xf32>
    %96 = math.sqrt %95 : vector<8x128xf32>
    %cst_37 = arith.constant dense<0.000000e+00> : vector<8xf32>
    %97 = vector.multi_reduction <add>, %96, %cst_37 [1] : vector<8x128xf32> to vector<8xf32>
    %98 = vector.shape_cast %97 : vector<8xf32> to vector<8x1xf32>
    %cst_38 = arith.constant 0.000000e+00 : f32
    %99 = vector.broadcast %cst_38 : f32 to vector<8x1xf32>
    %100 = arith.cmpf ogt, %98, %99 : vector<8x1xf32>
    %cst_39 = arith.constant 1.000000e+00 : f32
    %101 = vector.broadcast %cst_39 : f32 to vector<8x1xf32>
    %102 = arith.select %100, %98, %101 : vector<8x1xi1>, vector<8x1xf32>
    %103 = vector.broadcast %102 : vector<8x1xf32> to vector<8x128xf32>
    %104 = arith.divf %96, %103 : vector<8x128xf32>
    %c0_i32_40 = arith.constant 0 : i32
    %105 = arith.cmpi sgt, %arg0, %c0_i32_40 : i32
    %106 = arith.extui %105 : i1 to i32
    %c0_i32_41 = arith.constant 0 : i32
    %107 = arith.cmpi ne, %106, %c0_i32_41 : i32
    scf.if %107 {
      tpu.wait_dma2 semaphore(%arg10 : memref<!tpu.dma_semaphore, #tpu.memory_space<semaphore_mem>>) src(%arg8 : memref<8x128xf32, #tpu.memory_space<vmem>>) dst(%arg8 : memref<8x128xf32, #tpu.memory_space<vmem>>)
    } else {
    }
    %c0_42 = arith.constant 0 : index
    %c0_43 = arith.constant 0 : index
    %108 = vector.load %arg8[%c0_42, %c0_43] : memref<8x128xf32, #tpu.memory_space<vmem>>, vector<8x128xf32>
    tpu.vector_store %arg8[%c0_42, %c0_43], %104 {strides = array<i32>} : memref<8x128xf32, #tpu.memory_space<vmem>>, vector<8x128xf32>,
    %c8_i32 = arith.constant 8 : i32
    %109 = arith.muli %arg0, %c8_i32 : i32
    %c0_i32_44 = arith.constant 0 : i32
    %110 = arith.addi %109, %c0_i32_44 : i32
    %111 = arith.index_cast %110 : i32 to index
    %112 = memref.load %arg1[%111] : memref<8xi32, #tpu.memory_space<smem>>
    %c0_i32_45 = arith.constant 0 : i32
    %113 = tpu.memref_slice %arg8[%c0_i32_44, %c0_i32_45] : memref<8x128xf32, #tpu.memory_space<vmem>> -> memref<1x128xf32, #tpu.memory_space<vmem>>
    %c0_i32_46 = arith.constant 0 : i32
    %114 = tpu.memref_slice %arg6[%112, %c0_i32_46] : memref<32x128xf32, #tpu.memory_space<any>> -> memref<1x128xf32, #tpu.memory_space<any>>
    tpu.enqueue_dma source(%113 : memref<1x128xf32, #tpu.memory_space<vmem>>) target(%114 : memref<1x128xf32, #tpu.memory_space<any>>) target_semaphore(%arg10 : memref<!tpu.dma_semaphore, #tpu.memory_space<semaphore_mem>>)
    %c1_i32_47 = arith.constant 1 : i32
    %115 = arith.addi %109, %c1_i32_47 : i32
    %116 = arith.index_cast %115 : i32 to index
    %117 = memref.load %arg1[%116] : memref<8xi32, #tpu.memory_space<smem>>
    %c0_i32_48 = arith.constant 0 : i32
    %118 = tpu.memref_slice %arg8[%c1_i32_47, %c0_i32_48] : memref<8x128xf32, #tpu.memory_space<vmem>> -> memref<1x128xf32, #tpu.memory_space<vmem>>
    %c0_i32_49 = arith.constant 0 : i32
    %119 = tpu.memref_slice %arg6[%117, %c0_i32_49] : memref<32x128xf32, #tpu.memory_space<any>> -> memref<1x128xf32, #tpu.memory_space<any>>
    tpu.enqueue_dma source(%118 : memref<1x128xf32, #tpu.memory_space<vmem>>) target(%119 : memref<1x128xf32, #tpu.memory_space<any>>) target_semaphore(%arg10 : memref<!tpu.dma_semaphore, #tpu.memory_space<semaphore_mem>>)
    %c2_i32_50 = arith.constant 2 : i32
    %120 = arith.addi %109, %c2_i32_50 : i32
    %121 = arith.index_cast %120 : i32 to index
    %122 = memref.load %arg1[%121] : memref<8xi32, #tpu.memory_space<smem>>
    %c0_i32_51 = arith.constant 0 : i32
    %123 = tpu.memref_slice %arg8[%c2_i32_50, %c0_i32_51] : memref<8x128xf32, #tpu.memory_space<vmem>> -> memref<1x128xf32, #tpu.memory_space<vmem>>
    %c0_i32_52 = arith.constant 0 : i32
    %124 = tpu.memref_slice %arg6[%122, %c0_i32_52] : memref<32x128xf32, #tpu.memory_space<any>> -> memref<1x128xf32, #tpu.memory_space<any>>
    tpu.enqueue_dma source(%123 : memref<1x128xf32, #tpu.memory_space<vmem>>) target(%124 : memref<1x128xf32, #tpu.memory_space<any>>) target_semaphore(%arg10 : memref<!tpu.dma_semaphore, #tpu.memory_space<semaphore_mem>>)
    %c3_i32 = arith.constant 3 : i32
    %125 = arith.addi %109, %c3_i32 : i32
    %126 = arith.index_cast %125 : i32 to index
    %127 = memref.load %arg1[%126] : memref<8xi32, #tpu.memory_space<smem>>
    %c0_i32_53 = arith.constant 0 : i32
    %128 = tpu.memref_slice %arg8[%c3_i32, %c0_i32_53] : memref<8x128xf32, #tpu.memory_space<vmem>> -> memref<1x128xf32, #tpu.memory_space<vmem>>
    %c0_i32_54 = arith.constant 0 : i32
    %129 = tpu.memref_slice %arg6[%127, %c0_i32_54] : memref<32x128xf32, #tpu.memory_space<any>> -> memref<1x128xf32, #tpu.memory_space<any>>
    tpu.enqueue_dma source(%128 : memref<1x128xf32, #tpu.memory_space<vmem>>) target(%129 : memref<1x128xf32, #tpu.memory_space<any>>) target_semaphore(%arg10 : memref<!tpu.dma_semaphore, #tpu.memory_space<semaphore_mem>>)
    %c4_i32 = arith.constant 4 : i32
    %130 = arith.addi %109, %c4_i32 : i32
    %131 = arith.index_cast %130 : i32 to index
    %132 = memref.load %arg1[%131] : memref<8xi32, #tpu.memory_space<smem>>
    %c0_i32_55 = arith.constant 0 : i32
    %133 = tpu.memref_slice %arg8[%c4_i32, %c0_i32_55] : memref<8x128xf32, #tpu.memory_space<vmem>> -> memref<1x128xf32, #tpu.memory_space<vmem>>
    %c0_i32_56 = arith.constant 0 : i32
    %134 = tpu.memref_slice %arg6[%132, %c0_i32_56] : memref<32x128xf32, #tpu.memory_space<any>> -> memref<1x128xf32, #tpu.memory_space<any>>
    tpu.enqueue_dma source(%133 : memref<1x128xf32, #tpu.memory_space<vmem>>) target(%134 : memref<1x128xf32, #tpu.memory_space<any>>) target_semaphore(%arg10 : memref<!tpu.dma_semaphore, #tpu.memory_space<semaphore_mem>>)
    %c5_i32 = arith.constant 5 : i32
    %135 = arith.addi %109, %c5_i32 : i32
    %136 = arith.index_cast %135 : i32 to index
    %137 = memref.load %arg1[%136] : memref<8xi32, #tpu.memory_space<smem>>
    %c0_i32_57 = arith.constant 0 : i32
    %138 = tpu.memref_slice %arg8[%c5_i32, %c0_i32_57] : memref<8x128xf32, #tpu.memory_space<vmem>> -> memref<1x128xf32, #tpu.memory_space<vmem>>
    %c0_i32_58 = arith.constant 0 : i32
    %139 = tpu.memref_slice %arg6[%137, %c0_i32_58] : memref<32x128xf32, #tpu.memory_space<any>> -> memref<1x128xf32, #tpu.memory_space<any>>
    tpu.enqueue_dma source(%138 : memref<1x128xf32, #tpu.memory_space<vmem>>) target(%139 : memref<1x128xf32, #tpu.memory_space<any>>) target_semaphore(%arg10 : memref<!tpu.dma_semaphore, #tpu.memory_space<semaphore_mem>>)
    %c6_i32 = arith.constant 6 : i32
    %140 = arith.addi %109, %c6_i32 : i32
    %141 = arith.index_cast %140 : i32 to index
    %142 = memref.load %arg1[%141] : memref<8xi32, #tpu.memory_space<smem>>
    %c0_i32_59 = arith.constant 0 : i32
    %143 = tpu.memref_slice %arg8[%c6_i32, %c0_i32_59] : memref<8x128xf32, #tpu.memory_space<vmem>> -> memref<1x128xf32, #tpu.memory_space<vmem>>
    %c0_i32_60 = arith.constant 0 : i32
    %144 = tpu.memref_slice %arg6[%142, %c0_i32_60] : memref<32x128xf32, #tpu.memory_space<any>> -> memref<1x128xf32, #tpu.memory_space<any>>
    tpu.enqueue_dma source(%143 : memref<1x128xf32, #tpu.memory_space<vmem>>) target(%144 : memref<1x128xf32, #tpu.memory_space<any>>) target_semaphore(%arg10 : memref<!tpu.dma_semaphore, #tpu.memory_space<semaphore_mem>>)
    %c7_i32 = arith.constant 7 : i32
    %145 = arith.addi %109, %c7_i32 : i32
    %146 = arith.index_cast %145 : i32 to index
    %147 = memref.load %arg1[%146] : memref<8xi32, #tpu.memory_space<smem>>
    %c0_i32_61 = arith.constant 0 : i32
    %148 = tpu.memref_slice %arg8[%c7_i32, %c0_i32_61] : memref<8x128xf32, #tpu.memory_space<vmem>> -> memref<1x128xf32, #tpu.memory_space<vmem>>
    %c0_i32_62 = arith.constant 0 : i32
    %149 = tpu.memref_slice %arg6[%147, %c0_i32_62] : memref<32x128xf32, #tpu.memory_space<any>> -> memref<1x128xf32, #tpu.memory_space<any>>
    tpu.enqueue_dma source(%148 : memref<1x128xf32, #tpu.memory_space<vmem>>) target(%149 : memref<1x128xf32, #tpu.memory_space<any>>) target_semaphore(%arg10 : memref<!tpu.dma_semaphore, #tpu.memory_space<semaphore_mem>>)
    %c8_i32_63 = arith.constant 8 : i32
    %c0_i32_64 = arith.constant 0 : i32
    %150 = arith.cmpi eq, %arg0, %c0_i32_64 : i32
    %151 = arith.extui %150 : i1 to i32
    %c0_i32_65 = arith.constant 0 : i32
    %152 = arith.cmpi ne, %151, %c0_i32_65 : i32
    scf.if %152 {
      tpu.wait_dma2 semaphore(%arg10 : memref<!tpu.dma_semaphore, #tpu.memory_space<semaphore_mem>>) src(%arg8 : memref<8x128xf32, #tpu.memory_space<vmem>>) dst(%arg8 : memref<8x128xf32, #tpu.memory_space<vmem>>)
    } else {
    }
    return
  }
  func.func @transform_0(%arg0: i32, %arg1: memref<8xi32, #tpu.memory_space<smem>>) -> (i32, i32) {
    %c0_i32 = arith.constant 0 : i32
    %c0_i32_0 = arith.constant 0 : i32
    return %arg0, %c0_i32 : i32, i32
  }
  func.func @transform_1(%arg0: i32, %arg1: memref<8xi32, #tpu.memory_space<smem>>) -> (i32, i32) {
    %c0_i32 = arith.constant 0 : i32
    %c0_i32_0 = arith.constant 0 : i32
    return %arg0, %c0_i32 : i32, i32
  }
  func.func @transform_3(%arg0: i32, %arg1: memref<8xi32, #tpu.memory_space<smem>>) -> (i32, i32) {
    %c0_i32 = arith.constant 0 : i32
    %c0_i32_0 = arith.constant 0 : i32
    %c0_i32_1 = arith.constant 0 : i32
    return %c0_i32, %c0_i32_0 : i32, i32
  }
}

</mosaic_0001>

<llo_original>
// kernel: _proden_loss_prior.1
$region0: #{_proden_loss_prior.1}
  #allocation0 [shape = 'u32[]', space=smem, size = 0x4, offset = 0x4, fixed_abs, tag = 'smem constant byte address 0x4 - core index']
  #allocation1 [shape = 'u32[144,128]{1,0:T(1,128)}', space=vmem, size = 0x12000, scoped, tag = 'internal scratch']
  #allocation2 [shape = 'f32[2,8,128]{2,1,0:T(8,128)}', space=vmem, size = 0x2000, scoped, tag = 'scratch operand']
  #allocation3 [shape = 'f32[8,128]{1,0:T(8,128)}', space=vmem, size = 0x1000, scoped, tag = 'scratch operand']
  #allocation4 [shape = 's32[1]{0}', space=sflag, size = 0x4, scoped, tag = 'scratch operand']
  #allocation5 [shape = 's32[1]{0}', space=sflag, size = 0x4, scoped, tag = 'scratch operand']
  #allocation6 [shape = 's32[1]{0}', space=sflag, size = 0x4, scoped, tag = 'scoped memory for _proden_loss_prior.1']
  #allocation7 [shape = 'u8[512]{0}', space=smem, size = 0x200, scoped, tag = 'prefetched SMEM operand 0']
  #allocation10 [shape = 's32[]', space=sflag, size = 0x4, offset = 0, fixed_abs, tag = 'sflag constant byte address 0x0 - dummy sync flag']
  #allocation11 [shape = 's32[]', space=sflag, size = 0x4, offset = 0, fixed_abs, tag = 'sflag constant byte address 0x0 - dummy sync flag']
  #allocation12 [shape = 's32[]', space=sflag, size = 0x4, offset = 0, fixed_abs, tag = 'sflag constant byte address 0x0 - dummy sync flag']
  #allocation13 [shape = 's32[]', space=sflag, size = 0x4, offset = 0, fixed_abs, tag = 'sflag constant byte address 0x0 - dummy sync flag']
  #allocation14 [shape = 's32[]', space=sflag, size = 0x4, offset = 0, fixed_abs, tag = 'sflag constant byte address 0x0 - dummy sync flag']
  #allocation15 [shape = 's32[]', space=sflag, size = 0x4, offset = 0, fixed_abs, tag = 'sflag constant byte address 0x0 - dummy sync flag']
  #allocation16 [shape = 's32[]', space=sflag, size = 0x4, offset = 0, fixed_abs, tag = 'sflag constant byte address 0x0 - dummy sync flag']
  #allocation17 [shape = 's32[]', space=sflag, size = 0x4, offset = 0, fixed_abs, tag = 'sflag constant byte address 0x0 - dummy sync flag']
  #allocation18 [shape = 's32[]', space=sflag, size = 0x4, offset = 0, fixed_abs, tag = 'sflag constant byte address 0x0 - dummy sync flag']
  #allocation19 [shape = 's32[]', space=sflag, size = 0x4, offset = 0, fixed_abs, tag = 'sflag constant byte address 0x0 - dummy sync flag']
  #allocation20 [shape = 's32[]', space=sflag, size = 0x4, offset = 0, fixed_abs, tag = 'sflag constant byte address 0x0 - dummy sync flag']
  #allocation21 [shape = 's32[]', space=sflag, size = 0x4, offset = 0, fixed_abs, tag = 'sflag constant byte address 0x0 - dummy sync flag']
  #allocation22 [shape = 's32[]', space=sflag, size = 0x4, offset = 0, fixed_abs, tag = 'sflag constant byte address 0x0 - dummy sync flag']
  #allocation23 [shape = 's32[]', space=sflag, size = 0x4, offset = 0, fixed_abs, tag = 'sflag constant byte address 0x0 - dummy sync flag']
  #allocation24 [shape = 's32[]', space=sflag, size = 0x4, offset = 0, fixed_abs, tag = 'sflag constant byte address 0x0 - dummy sync flag']
  #allocation25 [shape = 's32[]', space=sflag, size = 0x4, offset = 0, fixed_abs, tag = 'sflag constant byte address 0x0 - dummy sync flag']
  #allocation26 [shape = 's32[]', space=sflag, size = 0x4, offset = 0, fixed_abs, tag = 'sflag constant byte address 0x0 - dummy sync flag']
  #allocation27 [shape = 's32[]', space=sflag, size = 0x4, offset = 0, fixed_abs, tag = 'sflag constant byte address 0x0 - dummy sync flag']
  #allocation28 [shape = 's32[]', space=sflag, size = 0x4, offset = 0, fixed_abs, tag = 'sflag constant byte address 0x0 - dummy sync flag']
  #allocation29 [shape = 's32[]', space=sflag, size = 0x4, offset = 0, fixed_abs, tag = 'sflag constant byte address 0x0 - dummy sync flag']
  #allocation30 [shape = 's32[]', space=sflag, size = 0x4, offset = 0, fixed_abs, tag = 'sflag constant byte address 0x0 - dummy sync flag']
  #allocation31 [shape = 's32[]', space=sflag, size = 0x4, offset = 0, fixed_abs, tag = 'sflag constant byte address 0x0 - dummy sync flag']
  #allocation32 [shape = 's32[]', space=sflag, size = 0x4, offset = 0, fixed_abs, tag = 'sflag constant byte address 0x0 - dummy sync flag']
  #allocation33 [shape = 's32[]', space=sflag, size = 0x4, offset = 0, fixed_abs, tag = 'sflag constant byte address 0x0 - dummy sync flag']
  %s0 = inlined_call_operand.vmem [shape: s32[8], index: 0, kind: input, shape index: {}]
  %s1 = inlined_call_operand.vmem [shape: f32[8,128], index: 1, kind: input, shape index: {}]
  %s2 = inlined_call_operand.vmem [shape: f32[8,128], index: 2, kind: input, shape index: {}]
  %s3 = inlined_call_operand.vmem [shape: f32[32,128], index: 3, kind: input, shape index: {}, may-alias: {3,5}]
  %s4 = inlined_call_operand.hbm [shape: f32[1,1], index: 4, kind: output, shape index: {0}]
  %s5 = inlined_call_operand.vmem [shape: f32[32,128], index: 5, kind: output, shape index: {1}, may-alias: {3,5}]
  %6 = xla_tuple %s4, %s5
  %s7 = sld [smem:[#allocation0]]
  $region754: #{_proden_loss_prior.1} parent=0
    _
  %s9 = ssub.s32 1, %s7
  %s10 = scalar_select 0, %s9, %s7
  %s11 = sshll.u32 %s0, 4
  %s12 = int_to_ptr.vmem [resolvable:$true] %s11
  %14 = dma.vmem_to_smem %s12, 16, [#allocation7], [#allocation6]
  %15 = dma.done [#allocation6], 16
  %16 = sfence
  $region1: #{_proden_loss_prior.1} parent=0
    #allocation8 [shape = 'u8[512]{0}', space=vmem, size = 0x400, scoped, tag = 'output window, operand 0, single buffered']
    #allocation9 [shape = 's32[1]{0}', space=sflag, size = 0x4, scoped, tag = 'scoped memory for _proden_loss_prior.1']
    %17 = vsyncpa [#allocation9], 0
    // Predicated region
    $region2: #{_proden_loss_prior.1} parent=1 // pred_check
      _
    $region3: #{_proden_loss_prior.1} parent=1 // pred_check_branch
      %19 = sbr.rel (0) target = $region5
    $region4: #{_proden_loss_prior.1} parent=1 // pred_region
      _
    $region5: #{_proden_loss_prior.1} parent=1 // pred_fallthru
      _
    // Predicated region
    $region6: #{_proden_loss_prior.1} parent=1 // pred_check
      _
    $region7: #{_proden_loss_prior.1} parent=1 // pred_check_branch
      %21 = sbr.rel (0) target = $region9
    $region8: #{_proden_loss_prior.1} parent=1 // pred_region
      _
    $region9: #{_proden_loss_prior.1} parent=1 // pred_fallthru
      _
    %s22 = ssub.s32 0, 0
    %s23 = ssub.s32 0, 0
    %p24 = scmp.ne.s32.totalorder 0, 0
    %p25 = scmp.lt.s32.totalorder 0, 0
    %p26 = pnand %p25, %p24
    %p27 = pneg %p26
    %s28 = sadd.s32 0, 2
    %s29 = scalar_select %p27, %s28, 0
    %p30 = scmp.eq.s32.totalorder 0, 0
    // Predicated region
    $region10: #{_proden_loss_prior.1} parent=1 // pred_check
      %p31 = pneg %p30
    $region11: #{_proden_loss_prior.1} parent=1 // pred_check_branch
      %33 = sbr.rel (%p31) target = $region13
    $region12: #{_proden_loss_prior.1} parent=1 // pred_region
      %vm34 = vcmask 0
      %35 = vst.msk [vmem:[#allocation8] sm:$0x1] %vm34, 0.0
      %s36 = sld [smem:[#allocation7]]
      %s37 = scalar_lea.vmem %s3, %s36
      %p39 = scmp.lt.u32.totalorder 1, 8
      %p40 = pneg %p39
      // Predicated region
      $region14: #{_proden_loss_prior.1} parent=12 // pred_check
        _
      $region15: #{_proden_loss_prior.1} parent=12 // pred_check_branch
        %42 = sbr.rel (%p39) target = $region17
      $region16: #{_proden_loss_prior.1} parent=12 // pred_region
        %s57 = sand.u32 1, 7
        %p58 = scmp.eq.s32.totalorder %s57, 0
        %p59 = pneg %p58
        // Predicated region
        $region29: #{_proden_loss_prior.1} parent=16 // pred_check
          _
        $region30: #{_proden_loss_prior.1} parent=16 // pred_check_branch
          %61 = sbr.rel (%p58) target = $region32
        $region31: #{_proden_loss_prior.1} parent=16 // pred_region
          %s62 = sand.u32 1, 7
          %s63 = ssub.s32 1, %s62
          %s64 = scalar_lea.vmem %s37, %s63
          %s65 = ssub.s32 1, %s62
          %s66 = scalar_lea.vmem [#allocation2], %s65
          %s67 = sshllo.u32 0, %s62
          loop: start=0, step=1, limit=1
          $region33: #{_proden_loss_prior.1} parent=31 // loop_pre_header
            _
          $region34: #{_proden_loss_prior.1} parent=31 // loop_header
            %s69 = sphi 0, %s73
            %p70 = scmp.ge.s32.totalorder %s69, 1
            %s74 = sphi %s64, %s64
            %s75 = sphi %s66, %s66
          $region35: #{_proden_loss_prior.1} parent=31 // loop_header_branch
            %72 = sbr.rel (%p70) target = $region39
          $region36: #{_proden_loss_prior.1} parent=31 // loop_body
            %v76 = vld [vmem:[%s74] sm:%s67]
            %77 = vst [vmem:[%s75] sm:%s67] %v76
          $region37: #{_proden_loss_prior.1} parent=31 // loop_footer
            %s73 = sadd.s32 1, %s69
          $region38: #{_proden_loss_prior.1} parent=31 // loop_footer_branch
            %68 = sbr.rel target = $region34
          $region39: #{_proden_loss_prior.1} parent=31 // loop_exit
            _
        $region32: #{_proden_loss_prior.1} parent=16 // pred_fallthru
          _
      $region17: #{_proden_loss_prior.1} parent=12 // pred_fallthru
        _
      // Predicated region
      $region18: #{_proden_loss_prior.1} parent=12 // pred_check
        %p43 = pneg %p39
      $region19: #{_proden_loss_prior.1} parent=12 // pred_check_branch
        %45 = sbr.rel (%p43) target = $region21
      $region20: #{_proden_loss_prior.1} parent=12 // pred_region
        %s46 = sshllo.u32 0, 1
        loop: start=0, step=1, limit=1
        $region22: #{_proden_loss_prior.1} parent=20 // loop_pre_header
          _
        $region23: #{_proden_loss_prior.1} parent=20 // loop_header
          %s48 = sphi 0, %s52
          %p49 = scmp.ge.s32.totalorder %s48, 1
          %s53 = sphi %s37, %s37
          %s54 = sphi [#allocation2], [#allocation2]
        $region24: #{_proden_loss_prior.1} parent=20 // loop_header_branch
          %51 = sbr.rel (%p49) target = $region28
        $region25: #{_proden_loss_prior.1} parent=20 // loop_body
          %v55 = vld [vmem:[%s53] sm:%s46]
          %56 = vst [vmem:[%s54] sm:%s46] %v55
        $region26: #{_proden_loss_prior.1} parent=20 // loop_footer
          %s52 = sadd.s32 1, %s48
        $region27: #{_proden_loss_prior.1} parent=20 // loop_footer_branch
          %47 = sbr.rel target = $region23
        $region28: #{_proden_loss_prior.1} parent=20 // loop_exit
          _
      $region21: #{_proden_loss_prior.1} parent=12 // pred_fallthru
        _
      // Predicated region
      $region40: #{_proden_loss_prior.1} parent=12 // pred_check
        _
      $region41: #{_proden_loss_prior.1} parent=12 // pred_check_branch
        %80 = sbr.rel (0) target = $region43
      $region42: #{_proden_loss_prior.1} parent=12 // pred_region
        %81 = vsyncadd [#allocation4], 16
      $region43: #{_proden_loss_prior.1} parent=12 // pred_fallthru
        _
      %s82 = sld [smem:[#allocation7 + $0x1]]
      %s83 = scalar_lea.vmem %s3, %s82
      %s84 = scalar_lea.vmem [#allocation2], 1
      %p86 = scmp.lt.u32.totalorder 1, 8
      %p87 = pneg %p86
      // Predicated region
      $region44: #{_proden_loss_prior.1} parent=12 // pred_check
        _
      $region45: #{_proden_loss_prior.1} parent=12 // pred_check_branch
        %89 = sbr.rel (%p86) target = $region47
      $region46: #{_proden_loss_prior.1} parent=12 // pred_region
        %s104 = sand.u32 1, 7
        %p105 = scmp.eq.s32.totalorder %s104, 0
        %p106 = pneg %p105
        // Predicated region
        $region59: #{_proden_loss_prior.1} parent=46 // pred_check
          _
        $region60: #{_proden_loss_prior.1} parent=46 // pred_check_branch
          %108 = sbr.rel (%p105) target = $region62
        $region61: #{_proden_loss_prior.1} parent=46 // pred_region
          %s109 = sand.u32 1, 7
          %s110 = ssub.s32 1, %s109
          %s111 = scalar_lea.vmem %s83, %s110
          %s112 = ssub.s32 1, %s109
          %s113 = scalar_lea.vmem %s84, %s112 [#allocation2]
          %s114 = sshllo.u32 0, %s109
          loop: start=0, step=1, limit=1
          $region63: #{_proden_loss_prior.1} parent=61 // loop_pre_header
            _
          $region64: #{_proden_loss_prior.1} parent=61 // loop_header
            %s116 = sphi 0, %s120
            %p117 = scmp.ge.s32.totalorder %s116, 1
            %s121 = sphi %s111, %s111
            %s122 = sphi %s113, %s113
          $region65: #{_proden_loss_prior.1} parent=61 // loop_header_branch
            %119 = sbr.rel (%p117) target = $region69
          $region66: #{_proden_loss_prior.1} parent=61 // loop_body
            %v123 = vld [vmem:[%s121] sm:%s114]
            %124 = vst [vmem:[%s122] sm:%s114] %v123
          $region67: #{_proden_loss_prior.1} parent=61 // loop_footer
            %s120 = sadd.s32 1, %s116
          $region68: #{_proden_loss_prior.1} parent=61 // loop_footer_branch
            %115 = sbr.rel target = $region64
          $region69: #{_proden_loss_prior.1} parent=61 // loop_exit
            _
        $region62: #{_proden_loss_prior.1} parent=46 // pred_fallthru
          _
      $region47: #{_proden_loss_prior.1} parent=12 // pred_fallthru
        _
      // Predicated region
      $region48: #{_proden_loss_prior.1} parent=12 // pred_check
        %p90 = pneg %p86
      $region49: #{_proden_loss_prior.1} parent=12 // pred_check_branch
        %92 = sbr.rel (%p90) target = $region51
      $region50: #{_proden_loss_prior.1} parent=12 // pred_region
        %s93 = sshllo.u32 0, 1
        loop: start=0, step=1, limit=1
        $region52: #{_proden_loss_prior.1} parent=50 // loop_pre_header
          _
        $region53: #{_proden_loss_prior.1} parent=50 // loop_header
          %s95 = sphi 0, %s99
          %p96 = scmp.ge.s32.totalorder %s95, 1
          %s100 = sphi %s83, %s83
          %s101 = sphi %s84, %s84
        $region54: #{_proden_loss_prior.1} parent=50 // loop_header_branch
          %98 = sbr.rel (%p96) target = $region58
        $region55: #{_proden_loss_prior.1} parent=50 // loop_body
          %v102 = vld [vmem:[%s100] sm:%s93]
          %103 = vst [vmem:[%s101] sm:%s93] %v102
        $region56: #{_proden_loss_prior.1} parent=50 // loop_footer
          %s99 = sadd.s32 1, %s95
        $region57: #{_proden_loss_prior.1} parent=50 // loop_footer_branch
          %94 = sbr.rel target = $region53
        $region58: #{_proden_loss_prior.1} parent=50 // loop_exit
          _
      $region51: #{_proden_loss_prior.1} parent=12 // pred_fallthru
        _
      // Predicated region
      $region70: #{_proden_loss_prior.1} parent=12 // pred_check
        _
      $region71: #{_proden_loss_prior.1} parent=12 // pred_check_branch
        %127 = sbr.rel (0) target = $region73
      $region72: #{_proden_loss_prior.1} parent=12 // pred_region
        %128 = vsyncadd [#allocation4], 16
      $region73: #{_proden_loss_prior.1} parent=12 // pred_fallthru
        _
      %s129 = sld [smem:[#allocation7 + $0x2]]
      %s130 = scalar_lea.vmem %s3, %s129
      %s131 = scalar_lea.vmem [#allocation2], 2
      %p133 = scmp.lt.u32.totalorder 1, 8
      %p134 = pneg %p133
      // Predicated region
      $region74: #{_proden_loss_prior.1} parent=12 // pred_check
        _
      $region75: #{_proden_loss_prior.1} parent=12 // pred_check_branch
        %136 = sbr.rel (%p133) target = $region77
      $region76: #{_proden_loss_prior.1} parent=12 // pred_region
        %s151 = sand.u32 1, 7
        %p152 = scmp.eq.s32.totalorder %s151, 0
        %p153 = pneg %p152
        // Predicated region
        $region89: #{_proden_loss_prior.1} parent=76 // pred_check
          _
        $region90: #{_proden_loss_prior.1} parent=76 // pred_check_branch
          %155 = sbr.rel (%p152) target = $region92
        $region91: #{_proden_loss_prior.1} parent=76 // pred_region
          %s156 = sand.u32 1, 7
          %s157 = ssub.s32 1, %s156
          %s158 = scalar_lea.vmem %s130, %s157
          %s159 = ssub.s32 1, %s156
          %s160 = scalar_lea.vmem %s131, %s159 [#allocation2]
          %s161 = sshllo.u32 0, %s156
          loop: start=0, step=1, limit=1
          $region93: #{_proden_loss_prior.1} parent=91 // loop_pre_header
            _
          $region94: #{_proden_loss_prior.1} parent=91 // loop_header
            %s163 = sphi 0, %s167
            %p164 = scmp.ge.s32.totalorder %s163, 1
            %s168 = sphi %s158, %s158
            %s169 = sphi %s160, %s160
          $region95: #{_proden_loss_prior.1} parent=91 // loop_header_branch
            %166 = sbr.rel (%p164) target = $region99
          $region96: #{_proden_loss_prior.1} parent=91 // loop_body
            %v170 = vld [vmem:[%s168] sm:%s161]
            %171 = vst [vmem:[%s169] sm:%s161] %v170
          $region97: #{_proden_loss_prior.1} parent=91 // loop_footer
            %s167 = sadd.s32 1, %s163
          $region98: #{_proden_loss_prior.1} parent=91 // loop_footer_branch
            %162 = sbr.rel target = $region94
          $region99: #{_proden_loss_prior.1} parent=91 // loop_exit
            _
        $region92: #{_proden_loss_prior.1} parent=76 // pred_fallthru
          _
      $region77: #{_proden_loss_prior.1} parent=12 // pred_fallthru
        _
      // Predicated region
      $region78: #{_proden_loss_prior.1} parent=12 // pred_check
        %p137 = pneg %p133
      $region79: #{_proden_loss_prior.1} parent=12 // pred_check_branch
        %139 = sbr.rel (%p137) target = $region81
      $region80: #{_proden_loss_prior.1} parent=12 // pred_region
        %s140 = sshllo.u32 0, 1
        loop: start=0, step=1, limit=1
        $region82: #{_proden_loss_prior.1} parent=80 // loop_pre_header
          _
        $region83: #{_proden_loss_prior.1} parent=80 // loop_header
          %s142 = sphi 0, %s146
          %p143 = scmp.ge.s32.totalorder %s142, 1
          %s147 = sphi %s130, %s130
          %s148 = sphi %s131, %s131
        $region84: #{_proden_loss_prior.1} parent=80 // loop_header_branch
          %145 = sbr.rel (%p143) target = $region88
        $region85: #{_proden_loss_prior.1} parent=80 // loop_body
          %v149 = vld [vmem:[%s147] sm:%s140]
          %150 = vst [vmem:[%s148] sm:%s140] %v149
        $region86: #{_proden_loss_prior.1} parent=80 // loop_footer
          %s146 = sadd.s32 1, %s142
        $region87: #{_proden_loss_prior.1} parent=80 // loop_footer_branch
          %141 = sbr.rel target = $region83
        $region88: #{_proden_loss_prior.1} parent=80 // loop_exit
          _
      $region81: #{_proden_loss_prior.1} parent=12 // pred_fallthru
        _
      // Predicated region
      $region100: #{_proden_loss_prior.1} parent=12 // pred_check
        _
      $region101: #{_proden_loss_prior.1} parent=12 // pred_check_branch
        %174 = sbr.rel (0) target = $region103
      $region102: #{_proden_loss_prior.1} parent=12 // pred_region
        %175 = vsyncadd [#allocation4], 16
      $region103: #{_proden_loss_prior.1} parent=12 // pred_fallthru
        _
      %s176 = sld [smem:[#allocation7 + $0x3]]
      %s177 = scalar_lea.vmem %s3, %s176
      %s178 = scalar_lea.vmem [#allocation2], 3
      %p180 = scmp.lt.u32.totalorder 1, 8
      %p181 = pneg %p180
      // Predicated region
      $region104: #{_proden_loss_prior.1} parent=12 // pred_check
        _
      $region105: #{_proden_loss_prior.1} parent=12 // pred_check_branch
        %183 = sbr.rel (%p180) target = $region107
      $region106: #{_proden_loss_prior.1} parent=12 // pred_region
        %s198 = sand.u32 1, 7
        %p199 = scmp.eq.s32.totalorder %s198, 0
        %p200 = pneg %p199
        // Predicated region
        $region119: #{_proden_loss_prior.1} parent=106 // pred_check
          _
        $region120: #{_proden_loss_prior.1} parent=106 // pred_check_branch
          %202 = sbr.rel (%p199) target = $region122
        $region121: #{_proden_loss_prior.1} parent=106 // pred_region
          %s203 = sand.u32 1, 7
          %s204 = ssub.s32 1, %s203
          %s205 = scalar_lea.vmem %s177, %s204
          %s206 = ssub.s32 1, %s203
          %s207 = scalar_lea.vmem %s178, %s206 [#allocation2]
          %s208 = sshllo.u32 0, %s203
          loop: start=0, step=1, limit=1
          $region123: #{_proden_loss_prior.1} parent=121 // loop_pre_header
            _
          $region124: #{_proden_loss_prior.1} parent=121 // loop_header
            %s210 = sphi 0, %s214
            %p211 = scmp.ge.s32.totalorder %s210, 1
            %s215 = sphi %s205, %s205
            %s216 = sphi %s207, %s207
          $region125: #{_proden_loss_prior.1} parent=121 // loop_header_branch
            %213 = sbr.rel (%p211) target = $region129
          $region126: #{_proden_loss_prior.1} parent=121 // loop_body
            %v217 = vld [vmem:[%s215] sm:%s208]
            %218 = vst [vmem:[%s216] sm:%s208] %v217
          $region127: #{_proden_loss_prior.1} parent=121 // loop_footer
            %s214 = sadd.s32 1, %s210
          $region128: #{_proden_loss_prior.1} parent=121 // loop_footer_branch
            %209 = sbr.rel target = $region124
          $region129: #{_proden_loss_prior.1} parent=121 // loop_exit
            _
        $region122: #{_proden_loss_prior.1} parent=106 // pred_fallthru
          _
      $region107: #{_proden_loss_prior.1} parent=12 // pred_fallthru
        _
      // Predicated region
      $region108: #{_proden_loss_prior.1} parent=12 // pred_check
        %p184 = pneg %p180
      $region109: #{_proden_loss_prior.1} parent=12 // pred_check_branch
        %186 = sbr.rel (%p184) target = $region111
      $region110: #{_proden_loss_prior.1} parent=12 // pred_region
        %s187 = sshllo.u32 0, 1
        loop: start=0, step=1, limit=1
        $region112: #{_proden_loss_prior.1} parent=110 // loop_pre_header
          _
        $region113: #{_proden_loss_prior.1} parent=110 // loop_header
          %s189 = sphi 0, %s193
          %p190 = scmp.ge.s32.totalorder %s189, 1
          %s194 = sphi %s177, %s177
          %s195 = sphi %s178, %s178
        $region114: #{_proden_loss_prior.1} parent=110 // loop_header_branch
          %192 = sbr.rel (%p190) target = $region118
        $region115: #{_proden_loss_prior.1} parent=110 // loop_body
          %v196 = vld [vmem:[%s194] sm:%s187]
          %197 = vst [vmem:[%s195] sm:%s187] %v196
        $region116: #{_proden_loss_prior.1} parent=110 // loop_footer
          %s193 = sadd.s32 1, %s189
        $region117: #{_proden_loss_prior.1} parent=110 // loop_footer_branch
          %188 = sbr.rel target = $region113
        $region118: #{_proden_loss_prior.1} parent=110 // loop_exit
          _
      $region111: #{_proden_loss_prior.1} parent=12 // pred_fallthru
        _
      // Predicated region
      $region130: #{_proden_loss_prior.1} parent=12 // pred_check
        _
      $region131: #{_proden_loss_prior.1} parent=12 // pred_check_branch
        %221 = sbr.rel (0) target = $region133
      $region132: #{_proden_loss_prior.1} parent=12 // pred_region
        %222 = vsyncadd [#allocation4], 16
      $region133: #{_proden_loss_prior.1} parent=12 // pred_fallthru
        _
      %s223 = sld [smem:[#allocation7 + $0x4]]
      %s224 = scalar_lea.vmem %s3, %s223
      %s225 = scalar_lea.vmem [#allocation2], 4
      %p227 = scmp.lt.u32.totalorder 1, 8
      %p228 = pneg %p227
      // Predicated region
      $region134: #{_proden_loss_prior.1} parent=12 // pred_check
        _
      $region135: #{_proden_loss_prior.1} parent=12 // pred_check_branch
        %230 = sbr.rel (%p227) target = $region137
      $region136: #{_proden_loss_prior.1} parent=12 // pred_region
        %s245 = sand.u32 1, 7
        %p246 = scmp.eq.s32.totalorder %s245, 0
        %p247 = pneg %p246
        // Predicated region
        $region149: #{_proden_loss_prior.1} parent=136 // pred_check
          _
        $region150: #{_proden_loss_prior.1} parent=136 // pred_check_branch
          %249 = sbr.rel (%p246) target = $region152
        $region151: #{_proden_loss_prior.1} parent=136 // pred_region
          %s250 = sand.u32 1, 7
          %s251 = ssub.s32 1, %s250
          %s252 = scalar_lea.vmem %s224, %s251
          %s253 = ssub.s32 1, %s250
          %s254 = scalar_lea.vmem %s225, %s253 [#allocation2]
          %s255 = sshllo.u32 0, %s250
          loop: start=0, step=1, limit=1
          $region153: #{_proden_loss_prior.1} parent=151 // loop_pre_header
            _
          $region154: #{_proden_loss_prior.1} parent=151 // loop_header
            %s257 = sphi 0, %s261
            %p258 = scmp.ge.s32.totalorder %s257, 1
            %s262 = sphi %s252, %s252
            %s263 = sphi %s254, %s254
          $region155: #{_proden_loss_prior.1} parent=151 // loop_header_branch
            %260 = sbr.rel (%p258) target = $region159
          $region156: #{_proden_loss_prior.1} parent=151 // loop_body
            %v264 = vld [vmem:[%s262] sm:%s255]
            %265 = vst [vmem:[%s263] sm:%s255] %v264
          $region157: #{_proden_loss_prior.1} parent=151 // loop_footer
            %s261 = sadd.s32 1, %s257
          $region158: #{_proden_loss_prior.1} parent=151 // loop_footer_branch
            %256 = sbr.rel target = $region154
          $region159: #{_proden_loss_prior.1} parent=151 // loop_exit
            _
        $region152: #{_proden_loss_prior.1} parent=136 // pred_fallthru
          _
      $region137: #{_proden_loss_prior.1} parent=12 // pred_fallthru
        _
      // Predicated region
      $region138: #{_proden_loss_prior.1} parent=12 // pred_check
        %p231 = pneg %p227
      $region139: #{_proden_loss_prior.1} parent=12 // pred_check_branch
        %233 = sbr.rel (%p231) target = $region141
      $region140: #{_proden_loss_prior.1} parent=12 // pred_region
        %s234 = sshllo.u32 0, 1
        loop: start=0, step=1, limit=1
        $region142: #{_proden_loss_prior.1} parent=140 // loop_pre_header
          _
        $region143: #{_proden_loss_prior.1} parent=140 // loop_header
          %s236 = sphi 0, %s240
          %p237 = scmp.ge.s32.totalorder %s236, 1
          %s241 = sphi %s224, %s224
          %s242 = sphi %s225, %s225
        $region144: #{_proden_loss_prior.1} parent=140 // loop_header_branch
          %239 = sbr.rel (%p237) target = $region148
        $region145: #{_proden_loss_prior.1} parent=140 // loop_body
          %v243 = vld [vmem:[%s241] sm:%s234]
          %244 = vst [vmem:[%s242] sm:%s234] %v243
        $region146: #{_proden_loss_prior.1} parent=140 // loop_footer
          %s240 = sadd.s32 1, %s236
        $region147: #{_proden_loss_prior.1} parent=140 // loop_footer_branch
          %235 = sbr.rel target = $region143
        $region148: #{_proden_loss_prior.1} parent=140 // loop_exit
          _
      $region141: #{_proden_loss_prior.1} parent=12 // pred_fallthru
        _
      // Predicated region
      $region160: #{_proden_loss_prior.1} parent=12 // pred_check
        _
      $region161: #{_proden_loss_prior.1} parent=12 // pred_check_branch
        %268 = sbr.rel (0) target = $region163
      $region162: #{_proden_loss_prior.1} parent=12 // pred_region
        %269 = vsyncadd [#allocation4], 16
      $region163: #{_proden_loss_prior.1} parent=12 // pred_fallthru
        _
      %s270 = sld [smem:[#allocation7 + $0x5]]
      %s271 = scalar_lea.vmem %s3, %s270
      %s272 = scalar_lea.vmem [#allocation2], 5
      %p274 = scmp.lt.u32.totalorder 1, 8
      %p275 = pneg %p274
      // Predicated region
      $region164: #{_proden_loss_prior.1} parent=12 // pred_check
        _
      $region165: #{_proden_loss_prior.1} parent=12 // pred_check_branch
        %277 = sbr.rel (%p274) target = $region167
      $region166: #{_proden_loss_prior.1} parent=12 // pred_region
        %s292 = sand.u32 1, 7
        %p293 = scmp.eq.s32.totalorder %s292, 0
        %p294 = pneg %p293
        // Predicated region
        $region179: #{_proden_loss_prior.1} parent=166 // pred_check
          _
        $region180: #{_proden_loss_prior.1} parent=166 // pred_check_branch
          %296 = sbr.rel (%p293) target = $region182
        $region181: #{_proden_loss_prior.1} parent=166 // pred_region
          %s297 = sand.u32 1, 7
          %s298 = ssub.s32 1, %s297
          %s299 = scalar_lea.vmem %s271, %s298
          %s300 = ssub.s32 1, %s297
          %s301 = scalar_lea.vmem %s272, %s300 [#allocation2]
          %s302 = sshllo.u32 0, %s297
          loop: start=0, step=1, limit=1
          $region183: #{_proden_loss_prior.1} parent=181 // loop_pre_header
            _
          $region184: #{_proden_loss_prior.1} parent=181 // loop_header
            %s304 = sphi 0, %s308
            %p305 = scmp.ge.s32.totalorder %s304, 1
            %s309 = sphi %s299, %s299
            %s310 = sphi %s301, %s301
          $region185: #{_proden_loss_prior.1} parent=181 // loop_header_branch
            %307 = sbr.rel (%p305) target = $region189
          $region186: #{_proden_loss_prior.1} parent=181 // loop_body
            %v311 = vld [vmem:[%s309] sm:%s302]
            %312 = vst [vmem:[%s310] sm:%s302] %v311
          $region187: #{_proden_loss_prior.1} parent=181 // loop_footer
            %s308 = sadd.s32 1, %s304
          $region188: #{_proden_loss_prior.1} parent=181 // loop_footer_branch
            %303 = sbr.rel target = $region184
          $region189: #{_proden_loss_prior.1} parent=181 // loop_exit
            _
        $region182: #{_proden_loss_prior.1} parent=166 // pred_fallthru
          _
      $region167: #{_proden_loss_prior.1} parent=12 // pred_fallthru
        _
      // Predicated region
      $region168: #{_proden_loss_prior.1} parent=12 // pred_check
        %p278 = pneg %p274
      $region169: #{_proden_loss_prior.1} parent=12 // pred_check_branch
        %280 = sbr.rel (%p278) target = $region171
      $region170: #{_proden_loss_prior.1} parent=12 // pred_region
        %s281 = sshllo.u32 0, 1
        loop: start=0, step=1, limit=1
        $region172: #{_proden_loss_prior.1} parent=170 // loop_pre_header
          _
        $region173: #{_proden_loss_prior.1} parent=170 // loop_header
          %s283 = sphi 0, %s287
          %p284 = scmp.ge.s32.totalorder %s283, 1
          %s288 = sphi %s271, %s271
          %s289 = sphi %s272, %s272
        $region174: #{_proden_loss_prior.1} parent=170 // loop_header_branch
          %286 = sbr.rel (%p284) target = $region178
        $region175: #{_proden_loss_prior.1} parent=170 // loop_body
          %v290 = vld [vmem:[%s288] sm:%s281]
          %291 = vst [vmem:[%s289] sm:%s281] %v290
        $region176: #{_proden_loss_prior.1} parent=170 // loop_footer
          %s287 = sadd.s32 1, %s283
        $region177: #{_proden_loss_prior.1} parent=170 // loop_footer_branch
          %282 = sbr.rel target = $region173
        $region178: #{_proden_loss_prior.1} parent=170 // loop_exit
          _
      $region171: #{_proden_loss_prior.1} parent=12 // pred_fallthru
        _
      // Predicated region
      $region190: #{_proden_loss_prior.1} parent=12 // pred_check
        _
      $region191: #{_proden_loss_prior.1} parent=12 // pred_check_branch
        %315 = sbr.rel (0) target = $region193
      $region192: #{_proden_loss_prior.1} parent=12 // pred_region
        %316 = vsyncadd [#allocation4], 16
      $region193: #{_proden_loss_prior.1} parent=12 // pred_fallthru
        _
      %s317 = sld [smem:[#allocation7 + $0x6]]
      %s318 = scalar_lea.vmem %s3, %s317
      %s319 = scalar_lea.vmem [#allocation2], 6
      %p321 = scmp.lt.u32.totalorder 1, 8
      %p322 = pneg %p321
      // Predicated region
      $region194: #{_proden_loss_prior.1} parent=12 // pred_check
        _
      $region195: #{_proden_loss_prior.1} parent=12 // pred_check_branch
        %324 = sbr.rel (%p321) target = $region197
      $region196: #{_proden_loss_prior.1} parent=12 // pred_region
        %s339 = sand.u32 1, 7
        %p340 = scmp.eq.s32.totalorder %s339, 0
        %p341 = pneg %p340
        // Predicated region
        $region209: #{_proden_loss_prior.1} parent=196 // pred_check
          _
        $region210: #{_proden_loss_prior.1} parent=196 // pred_check_branch
          %343 = sbr.rel (%p340) target = $region212
        $region211: #{_proden_loss_prior.1} parent=196 // pred_region
          %s344 = sand.u32 1, 7
          %s345 = ssub.s32 1, %s344
          %s346 = scalar_lea.vmem %s318, %s345
          %s347 = ssub.s32 1, %s344
          %s348 = scalar_lea.vmem %s319, %s347 [#allocation2]
          %s349 = sshllo.u32 0, %s344
          loop: start=0, step=1, limit=1
          $region213: #{_proden_loss_prior.1} parent=211 // loop_pre_header
            _
          $region214: #{_proden_loss_prior.1} parent=211 // loop_header
            %s351 = sphi 0, %s355
            %p352 = scmp.ge.s32.totalorder %s351, 1
            %s356 = sphi %s346, %s346
            %s357 = sphi %s348, %s348
          $region215: #{_proden_loss_prior.1} parent=211 // loop_header_branch
            %354 = sbr.rel (%p352) target = $region219
          $region216: #{_proden_loss_prior.1} parent=211 // loop_body
            %v358 = vld [vmem:[%s356] sm:%s349]
            %359 = vst [vmem:[%s357] sm:%s349] %v358
          $region217: #{_proden_loss_prior.1} parent=211 // loop_footer
            %s355 = sadd.s32 1, %s351
          $region218: #{_proden_loss_prior.1} parent=211 // loop_footer_branch
            %350 = sbr.rel target = $region214
          $region219: #{_proden_loss_prior.1} parent=211 // loop_exit
            _
        $region212: #{_proden_loss_prior.1} parent=196 // pred_fallthru
          _
      $region197: #{_proden_loss_prior.1} parent=12 // pred_fallthru
        _
      // Predicated region
      $region198: #{_proden_loss_prior.1} parent=12 // pred_check
        %p325 = pneg %p321
      $region199: #{_proden_loss_prior.1} parent=12 // pred_check_branch
        %327 = sbr.rel (%p325) target = $region201
      $region200: #{_proden_loss_prior.1} parent=12 // pred_region
        %s328 = sshllo.u32 0, 1
        loop: start=0, step=1, limit=1
        $region202: #{_proden_loss_prior.1} parent=200 // loop_pre_header
          _
        $region203: #{_proden_loss_prior.1} parent=200 // loop_header
          %s330 = sphi 0, %s334
          %p331 = scmp.ge.s32.totalorder %s330, 1
          %s335 = sphi %s318, %s318
          %s336 = sphi %s319, %s319
        $region204: #{_proden_loss_prior.1} parent=200 // loop_header_branch
          %333 = sbr.rel (%p331) target = $region208
        $region205: #{_proden_loss_prior.1} parent=200 // loop_body
          %v337 = vld [vmem:[%s335] sm:%s328]
          %338 = vst [vmem:[%s336] sm:%s328] %v337
        $region206: #{_proden_loss_prior.1} parent=200 // loop_footer
          %s334 = sadd.s32 1, %s330
        $region207: #{_proden_loss_prior.1} parent=200 // loop_footer_branch
          %329 = sbr.rel target = $region203
        $region208: #{_proden_loss_prior.1} parent=200 // loop_exit
          _
      $region201: #{_proden_loss_prior.1} parent=12 // pred_fallthru
        _
      // Predicated region
      $region220: #{_proden_loss_prior.1} parent=12 // pred_check
        _
      $region221: #{_proden_loss_prior.1} parent=12 // pred_check_branch
        %362 = sbr.rel (0) target = $region223
      $region222: #{_proden_loss_prior.1} parent=12 // pred_region
        %363 = vsyncadd [#allocation4], 16
      $region223: #{_proden_loss_prior.1} parent=12 // pred_fallthru
        _
      %s364 = sld [smem:[#allocation7 + $0x7]]
      %s365 = scalar_lea.vmem %s3, %s364
      %s366 = scalar_lea.vmem [#allocation2], 7
      %p368 = scmp.lt.u32.totalorder 1, 8
      %p369 = pneg %p368
      // Predicated region
      $region224: #{_proden_loss_prior.1} parent=12 // pred_check
        _
      $region225: #{_proden_loss_prior.1} parent=12 // pred_check_branch
        %371 = sbr.rel (%p368) target = $region227
      $region226: #{_proden_loss_prior.1} parent=12 // pred_region
        %s386 = sand.u32 1, 7
        %p387 = scmp.eq.s32.totalorder %s386, 0
        %p388 = pneg %p387
        // Predicated region
        $region239: #{_proden_loss_prior.1} parent=226 // pred_check
          _
        $region240: #{_proden_loss_prior.1} parent=226 // pred_check_branch
          %390 = sbr.rel (%p387) target = $region242
        $region241: #{_proden_loss_prior.1} parent=226 // pred_region
          %s391 = sand.u32 1, 7
          %s392 = ssub.s32 1, %s391
          %s393 = scalar_lea.vmem %s365, %s392
          %s394 = ssub.s32 1, %s391
          %s395 = scalar_lea.vmem %s366, %s394 [#allocation2]
          %s396 = sshllo.u32 0, %s391
          loop: start=0, step=1, limit=1
          $region243: #{_proden_loss_prior.1} parent=241 // loop_pre_header
            _
          $region244: #{_proden_loss_prior.1} parent=241 // loop_header
            %s398 = sphi 0, %s402
            %p399 = scmp.ge.s32.totalorder %s398, 1
            %s403 = sphi %s393, %s393
            %s404 = sphi %s395, %s395
          $region245: #{_proden_loss_prior.1} parent=241 // loop_header_branch
            %401 = sbr.rel (%p399) target = $region249
          $region246: #{_proden_loss_prior.1} parent=241 // loop_body
            %v405 = vld [vmem:[%s403] sm:%s396]
            %406 = vst [vmem:[%s404] sm:%s396] %v405
          $region247: #{_proden_loss_prior.1} parent=241 // loop_footer
            %s402 = sadd.s32 1, %s398
          $region248: #{_proden_loss_prior.1} parent=241 // loop_footer_branch
            %397 = sbr.rel target = $region244
          $region249: #{_proden_loss_prior.1} parent=241 // loop_exit
            _
        $region242: #{_proden_loss_prior.1} parent=226 // pred_fallthru
          _
      $region227: #{_proden_loss_prior.1} parent=12 // pred_fallthru
        _
      // Predicated region
      $region228: #{_proden_loss_prior.1} parent=12 // pred_check
        %p372 = pneg %p368
      $region229: #{_proden_loss_prior.1} parent=12 // pred_check_branch
        %374 = sbr.rel (%p372) target = $region231
      $region230: #{_proden_loss_prior.1} parent=12 // pred_region
        %s375 = sshllo.u32 0, 1
        loop: start=0, step=1, limit=1
        $region232: #{_proden_loss_prior.1} parent=230 // loop_pre_header
          _
        $region233: #{_proden_loss_prior.1} parent=230 // loop_header
          %s377 = sphi 0, %s381
          %p378 = scmp.ge.s32.totalorder %s377, 1
          %s382 = sphi %s365, %s365
          %s383 = sphi %s366, %s366
        $region234: #{_proden_loss_prior.1} parent=230 // loop_header_branch
          %380 = sbr.rel (%p378) target = $region238
        $region235: #{_proden_loss_prior.1} parent=230 // loop_body
          %v384 = vld [vmem:[%s382] sm:%s375]
          %385 = vst [vmem:[%s383] sm:%s375] %v384
        $region236: #{_proden_loss_prior.1} parent=230 // loop_footer
          %s381 = sadd.s32 1, %s377
        $region237: #{_proden_loss_prior.1} parent=230 // loop_footer_branch
          %376 = sbr.rel target = $region233
        $region238: #{_proden_loss_prior.1} parent=230 // loop_exit
          _
      $region231: #{_proden_loss_prior.1} parent=12 // pred_fallthru
        _
      // Predicated region
      $region250: #{_proden_loss_prior.1} parent=12 // pred_check
        _
      $region251: #{_proden_loss_prior.1} parent=12 // pred_check_branch
        %409 = sbr.rel (0) target = $region253
      $region252: #{_proden_loss_prior.1} parent=12 // pred_region
        %410 = vsyncadd [#allocation4], 16
      $region253: #{_proden_loss_prior.1} parent=12 // pred_fallthru
        _
    $region13: #{_proden_loss_prior.1} parent=1 // pred_fallthru
      _
    %v411 = vld [vmem:[%s1] sm:$0xff]
    %v412 = vld [vmem:[%s2] sm:$0xff]
    %413 = vmax.xlane.f32.xlu0 %v411
    %v414 = vpop.xlane.xlu0 %413
    %v415 = vsub.f32 %v411, %v414
    %v416 = vmul.f32 %v415, 1.442695
    %v417 = vpow.pop %v416
    %418 = vadd.xlane.f32.xlu0 %v417
    %v419 = vpop.xlane.xlu0 %418
    %v420 = vrcp.pop %v419
    %v421 = vmul.f32 %v417, %v420
    %v422 = vlog2.pop %v419
    %v423 = vmul.f32 %v422, 0.6931472
    %v424 = vsub.f32 %v415, %v423
    %425 = vmax.xlane.f32.xlu0 %v412
    %v426 = vpop.xlane.xlu0 %425
    %v427 = vsub.f32 %v412, %v426
    %v428 = vmul.f32 %v427, 1.442695
    %v429 = vpow.pop %v428
    %430 = vadd.xlane.f32.xlu0 %v429
    %v431 = vpop.xlane.xlu0 %430
    %v432 = vrcp.pop %v431
    %v433 = vmul.f32 %v429, %v432
    %v434 = vlog2.pop %v431
    %v435 = vmul.f32 %v434, 0.6931472
    %v436 = vsub.f32 %v427, %v435
    %s437 = smul.u32 %s29, 8
    %s438 = scalar_lea.vmem [#allocation2], %s437
    %s439 = smul.u32 8, 1
    %s440 = sshll.u32 %s439, 4
    %441 = dma.done [#allocation4], %s440
    %s442 = sadd.s32 0, 1
    %p443 = scmp.lt.s32.totalorder %s442, 1
    // Predicated region
    $region254: #{_proden_loss_prior.1} parent=1 // pred_check
      %p444 = pneg %p443
    $region255: #{_proden_loss_prior.1} parent=1 // pred_check_branch
      %446 = sbr.rel (%p444) target = $region257
    $region256: #{_proden_loss_prior.1} parent=1 // pred_region
      %s447 = ssub.s32 1, %s29
      %s448 = smul.u32 %s442, 8
      %s449 = sld [smem:[#allocation7 + %s448]]
      %s450 = scalar_lea.vmem %s3, %s449
      %s451 = smul.u32 %s447, 8
      %s452 = scalar_lea.vmem [#allocation2], %s451
      %p454 = scmp.lt.u32.totalorder 1, 8
      %p455 = pneg %p454
      // Predicated region
      $region258: #{_proden_loss_prior.1} parent=256 // pred_check
        _
      $region259: #{_proden_loss_prior.1} parent=256 // pred_check_branch
        %457 = sbr.rel (%p454) target = $region261
      $region260: #{_proden_loss_prior.1} parent=256 // pred_region
        %s472 = sand.u32 1, 7
        %p473 = scmp.eq.s32.totalorder %s472, 0
        %p474 = pneg %p473
        // Predicated region
        $region273: #{_proden_loss_prior.1} parent=260 // pred_check
          _
        $region274: #{_proden_loss_prior.1} parent=260 // pred_check_branch
          %476 = sbr.rel (%p473) target = $region276
        $region275: #{_proden_loss_prior.1} parent=260 // pred_region
          %s477 = sand.u32 1, 7
          %s478 = ssub.s32 1, %s477
          %s479 = scalar_lea.vmem %s450, %s478
          %s480 = ssub.s32 1, %s477
          %s481 = scalar_lea.vmem %s452, %s480 [#allocation2]
          %s482 = sshllo.u32 0, %s477
          loop: start=0, step=1, limit=1
          $region277: #{_proden_loss_prior.1} parent=275 // loop_pre_header
            _
          $region278: #{_proden_loss_prior.1} parent=275 // loop_header
            %s484 = sphi 0, %s488
            %p485 = scmp.ge.s32.totalorder %s484, 1
            %s489 = sphi %s479, %s479
            %s490 = sphi %s481, %s481
          $region279: #{_proden_loss_prior.1} parent=275 // loop_header_branch
            %487 = sbr.rel (%p485) target = $region283
          $region280: #{_proden_loss_prior.1} parent=275 // loop_body
            %v491 = vld [vmem:[%s489] sm:%s482]
            %492 = vst [vmem:[%s490] sm:%s482] %v491
          $region281: #{_proden_loss_prior.1} parent=275 // loop_footer
            %s488 = sadd.s32 1, %s484
          $region282: #{_proden_loss_prior.1} parent=275 // loop_footer_branch
            %483 = sbr.rel target = $region278
          $region283: #{_proden_loss_prior.1} parent=275 // loop_exit
            _
        $region276: #{_proden_loss_prior.1} parent=260 // pred_fallthru
          _
      $region261: #{_proden_loss_prior.1} parent=256 // pred_fallthru
        _
      // Predicated region
      $region262: #{_proden_loss_prior.1} parent=256 // pred_check
        %p458 = pneg %p454
      $region263: #{_proden_loss_prior.1} parent=256 // pred_check_branch
        %460 = sbr.rel (%p458) target = $region265
      $region264: #{_proden_loss_prior.1} parent=256 // pred_region
        %s461 = sshllo.u32 0, 1
        loop: start=0, step=1, limit=1
        $region266: #{_proden_loss_prior.1} parent=264 // loop_pre_header
          _
        $region267: #{_proden_loss_prior.1} parent=264 // loop_header
          %s463 = sphi 0, %s467
          %p464 = scmp.ge.s32.totalorder %s463, 1
          %s468 = sphi %s450, %s450
          %s469 = sphi %s452, %s452
        $region268: #{_proden_loss_prior.1} parent=264 // loop_header_branch
          %466 = sbr.rel (%p464) target = $region272
        $region269: #{_proden_loss_prior.1} parent=264 // loop_body
          %v470 = vld [vmem:[%s468] sm:%s461]
          %471 = vst [vmem:[%s469] sm:%s461] %v470
        $region270: #{_proden_loss_prior.1} parent=264 // loop_footer
          %s467 = sadd.s32 1, %s463
        $region271: #{_proden_loss_prior.1} parent=264 // loop_footer_branch
          %462 = sbr.rel target = $region267
        $region272: #{_proden_loss_prior.1} parent=264 // loop_exit
          _
      $region265: #{_proden_loss_prior.1} parent=256 // pred_fallthru
        _
      // Predicated region
      $region284: #{_proden_loss_prior.1} parent=256 // pred_check
        _
      $region285: #{_proden_loss_prior.1} parent=256 // pred_check_branch
        %495 = sbr.rel (0) target = $region287
      $region286: #{_proden_loss_prior.1} parent=256 // pred_region
        %496 = vsyncadd [#allocation4], 16
      $region287: #{_proden_loss_prior.1} parent=256 // pred_fallthru
        _
      %s497 = sadd.s32 %s448, 1
      %s498 = sld [smem:[#allocation7 + %s497]]
      %s499 = scalar_lea.vmem %s3, %s498
      %s500 = sadd.s32 1, %s451
      %s501 = scalar_lea.vmem [#allocation2], %s500
      %p503 = scmp.lt.u32.totalorder 1, 8
      %p504 = pneg %p503
      // Predicated region
      $region288: #{_proden_loss_prior.1} parent=256 // pred_check
        _
      $region289: #{_proden_loss_prior.1} parent=256 // pred_check_branch
        %506 = sbr.rel (%p503) target = $region291
      $region290: #{_proden_loss_prior.1} parent=256 // pred_region
        %s521 = sand.u32 1, 7
        %p522 = scmp.eq.s32.totalorder %s521, 0
        %p523 = pneg %p522
        // Predicated region
        $region303: #{_proden_loss_prior.1} parent=290 // pred_check
          _
        $region304: #{_proden_loss_prior.1} parent=290 // pred_check_branch
          %525 = sbr.rel (%p522) target = $region306
        $region305: #{_proden_loss_prior.1} parent=290 // pred_region
          %s526 = sand.u32 1, 7
          %s527 = ssub.s32 1, %s526
          %s528 = scalar_lea.vmem %s499, %s527
          %s529 = ssub.s32 1, %s526
          %s530 = scalar_lea.vmem %s501, %s529 [#allocation2]
          %s531 = sshllo.u32 0, %s526
          loop: start=0, step=1, limit=1
          $region307: #{_proden_loss_prior.1} parent=305 // loop_pre_header
            _
          $region308: #{_proden_loss_prior.1} parent=305 // loop_header
            %s533 = sphi 0, %s537
            %p534 = scmp.ge.s32.totalorder %s533, 1
            %s538 = sphi %s528, %s528
            %s539 = sphi %s530, %s530
          $region309: #{_proden_loss_prior.1} parent=305 // loop_header_branch
            %536 = sbr.rel (%p534) target = $region313
          $region310: #{_proden_loss_prior.1} parent=305 // loop_body
            %v540 = vld [vmem:[%s538] sm:%s531]
            %541 = vst [vmem:[%s539] sm:%s531] %v540
          $region311: #{_proden_loss_prior.1} parent=305 // loop_footer
            %s537 = sadd.s32 1, %s533
          $region312: #{_proden_loss_prior.1} parent=305 // loop_footer_branch
            %532 = sbr.rel target = $region308
          $region313: #{_proden_loss_prior.1} parent=305 // loop_exit
            _
        $region306: #{_proden_loss_prior.1} parent=290 // pred_fallthru
          _
      $region291: #{_proden_loss_prior.1} parent=256 // pred_fallthru
        _
      // Predicated region
      $region292: #{_proden_loss_prior.1} parent=256 // pred_check
        %p507 = pneg %p503
      $region293: #{_proden_loss_prior.1} parent=256 // pred_check_branch
        %509 = sbr.rel (%p507) target = $region295
      $region294: #{_proden_loss_prior.1} parent=256 // pred_region
        %s510 = sshllo.u32 0, 1
        loop: start=0, step=1, limit=1
        $region296: #{_proden_loss_prior.1} parent=294 // loop_pre_header
          _
        $region297: #{_proden_loss_prior.1} parent=294 // loop_header
          %s512 = sphi 0, %s516
          %p513 = scmp.ge.s32.totalorder %s512, 1
          %s517 = sphi %s499, %s499
          %s518 = sphi %s501, %s501
        $region298: #{_proden_loss_prior.1} parent=294 // loop_header_branch
          %515 = sbr.rel (%p513) target = $region302
        $region299: #{_proden_loss_prior.1} parent=294 // loop_body
          %v519 = vld [vmem:[%s517] sm:%s510]
          %520 = vst [vmem:[%s518] sm:%s510] %v519
        $region300: #{_proden_loss_prior.1} parent=294 // loop_footer
          %s516 = sadd.s32 1, %s512
        $region301: #{_proden_loss_prior.1} parent=294 // loop_footer_branch
          %511 = sbr.rel target = $region297
        $region302: #{_proden_loss_prior.1} parent=294 // loop_exit
          _
      $region295: #{_proden_loss_prior.1} parent=256 // pred_fallthru
        _
      // Predicated region
      $region314: #{_proden_loss_prior.1} parent=256 // pred_check
        _
      $region315: #{_proden_loss_prior.1} parent=256 // pred_check_branch
        %544 = sbr.rel (0) target = $region317
      $region316: #{_proden_loss_prior.1} parent=256 // pred_region
        %545 = vsyncadd [#allocation4], 16
      $region317: #{_proden_loss_prior.1} parent=256 // pred_fallthru
        _
      %s546 = sadd.s32 %s448, 2
      %s547 = sld [smem:[#allocation7 + %s546]]
      %s548 = scalar_lea.vmem %s3, %s547
      %s549 = sadd.s32 2, %s451
      %s550 = scalar_lea.vmem [#allocation2], %s549
      %p552 = scmp.lt.u32.totalorder 1, 8
      %p553 = pneg %p552
      // Predicated region
      $region318: #{_proden_loss_prior.1} parent=256 // pred_check
        _
      $region319: #{_proden_loss_prior.1} parent=256 // pred_check_branch
        %555 = sbr.rel (%p552) target = $region321
      $region320: #{_proden_loss_prior.1} parent=256 // pred_region
        %s570 = sand.u32 1, 7
        %p571 = scmp.eq.s32.totalorder %s570, 0
        %p572 = pneg %p571
        // Predicated region
        $region333: #{_proden_loss_prior.1} parent=320 // pred_check
          _
        $region334: #{_proden_loss_prior.1} parent=320 // pred_check_branch
          %574 = sbr.rel (%p571) target = $region336
        $region335: #{_proden_loss_prior.1} parent=320 // pred_region
          %s575 = sand.u32 1, 7
          %s576 = ssub.s32 1, %s575
          %s577 = scalar_lea.vmem %s548, %s576
          %s578 = ssub.s32 1, %s575
          %s579 = scalar_lea.vmem %s550, %s578 [#allocation2]
          %s580 = sshllo.u32 0, %s575
          loop: start=0, step=1, limit=1
          $region337: #{_proden_loss_prior.1} parent=335 // loop_pre_header
            _
          $region338: #{_proden_loss_prior.1} parent=335 // loop_header
            %s582 = sphi 0, %s586
            %p583 = scmp.ge.s32.totalorder %s582, 1
            %s587 = sphi %s577, %s577
            %s588 = sphi %s579, %s579
          $region339: #{_proden_loss_prior.1} parent=335 // loop_header_branch
            %585 = sbr.rel (%p583) target = $region343
          $region340: #{_proden_loss_prior.1} parent=335 // loop_body
            %v589 = vld [vmem:[%s587] sm:%s580]
            %590 = vst [vmem:[%s588] sm:%s580] %v589
          $region341: #{_proden_loss_prior.1} parent=335 // loop_footer
            %s586 = sadd.s32 1, %s582
          $region342: #{_proden_loss_prior.1} parent=335 // loop_footer_branch
            %581 = sbr.rel target = $region338
          $region343: #{_proden_loss_prior.1} parent=335 // loop_exit
            _
        $region336: #{_proden_loss_prior.1} parent=320 // pred_fallthru
          _
      $region321: #{_proden_loss_prior.1} parent=256 // pred_fallthru
        _
      // Predicated region
      $region322: #{_proden_loss_prior.1} parent=256 // pred_check
        %p556 = pneg %p552
      $region323: #{_proden_loss_prior.1} parent=256 // pred_check_branch
        %558 = sbr.rel (%p556) target = $region325
      $region324: #{_proden_loss_prior.1} parent=256 // pred_region
        %s559 = sshllo.u32 0, 1
        loop: start=0, step=1, limit=1
        $region326: #{_proden_loss_prior.1} parent=324 // loop_pre_header
          _
        $region327: #{_proden_loss_prior.1} parent=324 // loop_header
          %s561 = sphi 0, %s565
          %p562 = scmp.ge.s32.totalorder %s561, 1
          %s566 = sphi %s548, %s548
          %s567 = sphi %s550, %s550
        $region328: #{_proden_loss_prior.1} parent=324 // loop_header_branch
          %564 = sbr.rel (%p562) target = $region332
        $region329: #{_proden_loss_prior.1} parent=324 // loop_body
          %v568 = vld [vmem:[%s566] sm:%s559]
          %569 = vst [vmem:[%s567] sm:%s559] %v568
        $region330: #{_proden_loss_prior.1} parent=324 // loop_footer
          %s565 = sadd.s32 1, %s561
        $region331: #{_proden_loss_prior.1} parent=324 // loop_footer_branch
          %560 = sbr.rel target = $region327
        $region332: #{_proden_loss_prior.1} parent=324 // loop_exit
          _
      $region325: #{_proden_loss_prior.1} parent=256 // pred_fallthru
        _
      // Predicated region
      $region344: #{_proden_loss_prior.1} parent=256 // pred_check
        _
      $region345: #{_proden_loss_prior.1} parent=256 // pred_check_branch
        %593 = sbr.rel (0) target = $region347
      $region346: #{_proden_loss_prior.1} parent=256 // pred_region
        %594 = vsyncadd [#allocation4], 16
      $region347: #{_proden_loss_prior.1} parent=256 // pred_fallthru
        _
      %s595 = sadd.s32 %s448, 3
      %s596 = sld [smem:[#allocation7 + %s595]]
      %s597 = scalar_lea.vmem %s3, %s596
      %s598 = sadd.s32 3, %s451
      %s599 = scalar_lea.vmem [#allocation2], %s598
      %p601 = scmp.lt.u32.totalorder 1, 8
      %p602 = pneg %p601
      // Predicated region
      $region348: #{_proden_loss_prior.1} parent=256 // pred_check
        _
      $region349: #{_proden_loss_prior.1} parent=256 // pred_check_branch
        %604 = sbr.rel (%p601) target = $region351
      $region350: #{_proden_loss_prior.1} parent=256 // pred_region
        %s619 = sand.u32 1, 7
        %p620 = scmp.eq.s32.totalorder %s619, 0
        %p621 = pneg %p620
        // Predicated region
        $region363: #{_proden_loss_prior.1} parent=350 // pred_check
          _
        $region364: #{_proden_loss_prior.1} parent=350 // pred_check_branch
          %623 = sbr.rel (%p620) target = $region366
        $region365: #{_proden_loss_prior.1} parent=350 // pred_region
          %s624 = sand.u32 1, 7
          %s625 = ssub.s32 1, %s624
          %s626 = scalar_lea.vmem %s597, %s625
          %s627 = ssub.s32 1, %s624
          %s628 = scalar_lea.vmem %s599, %s627 [#allocation2]
          %s629 = sshllo.u32 0, %s624
          loop: start=0, step=1, limit=1
          $region367: #{_proden_loss_prior.1} parent=365 // loop_pre_header
            _
          $region368: #{_proden_loss_prior.1} parent=365 // loop_header
            %s631 = sphi 0, %s635
            %p632 = scmp.ge.s32.totalorder %s631, 1
            %s636 = sphi %s626, %s626
            %s637 = sphi %s628, %s628
          $region369: #{_proden_loss_prior.1} parent=365 // loop_header_branch
            %634 = sbr.rel (%p632) target = $region373
          $region370: #{_proden_loss_prior.1} parent=365 // loop_body
            %v638 = vld [vmem:[%s636] sm:%s629]
            %639 = vst [vmem:[%s637] sm:%s629] %v638
          $region371: #{_proden_loss_prior.1} parent=365 // loop_footer
            %s635 = sadd.s32 1, %s631
          $region372: #{_proden_loss_prior.1} parent=365 // loop_footer_branch
            %630 = sbr.rel target = $region368
          $region373: #{_proden_loss_prior.1} parent=365 // loop_exit
            _
        $region366: #{_proden_loss_prior.1} parent=350 // pred_fallthru
          _
      $region351: #{_proden_loss_prior.1} parent=256 // pred_fallthru
        _
      // Predicated region
      $region352: #{_proden_loss_prior.1} parent=256 // pred_check
        %p605 = pneg %p601
      $region353: #{_proden_loss_prior.1} parent=256 // pred_check_branch
        %607 = sbr.rel (%p605) target = $region355
      $region354: #{_proden_loss_prior.1} parent=256 // pred_region
        %s608 = sshllo.u32 0, 1
        loop: start=0, step=1, limit=1
        $region356: #{_proden_loss_prior.1} parent=354 // loop_pre_header
          _
        $region357: #{_proden_loss_prior.1} parent=354 // loop_header
          %s610 = sphi 0, %s614
          %p611 = scmp.ge.s32.totalorder %s610, 1
          %s615 = sphi %s597, %s597
          %s616 = sphi %s599, %s599
        $region358: #{_proden_loss_prior.1} parent=354 // loop_header_branch
          %613 = sbr.rel (%p611) target = $region362
        $region359: #{_proden_loss_prior.1} parent=354 // loop_body
          %v617 = vld [vmem:[%s615] sm:%s608]
          %618 = vst [vmem:[%s616] sm:%s608] %v617
        $region360: #{_proden_loss_prior.1} parent=354 // loop_footer
          %s614 = sadd.s32 1, %s610
        $region361: #{_proden_loss_prior.1} parent=354 // loop_footer_branch
          %609 = sbr.rel target = $region357
        $region362: #{_proden_loss_prior.1} parent=354 // loop_exit
          _
      $region355: #{_proden_loss_prior.1} parent=256 // pred_fallthru
        _
      // Predicated region
      $region374: #{_proden_loss_prior.1} parent=256 // pred_check
        _
      $region375: #{_proden_loss_prior.1} parent=256 // pred_check_branch
        %642 = sbr.rel (0) target = $region377
      $region376: #{_proden_loss_prior.1} parent=256 // pred_region
        %643 = vsyncadd [#allocation4], 16
      $region377: #{_proden_loss_prior.1} parent=256 // pred_fallthru
        _
      %s644 = sadd.s32 %s448, 4
      %s645 = sld [smem:[#allocation7 + %s644]]
      %s646 = scalar_lea.vmem %s3, %s645
      %s647 = sadd.s32 4, %s451
      %s648 = scalar_lea.vmem [#allocation2], %s647
      %p650 = scmp.lt.u32.totalorder 1, 8
      %p651 = pneg %p650
      // Predicated region
      $region378: #{_proden_loss_prior.1} parent=256 // pred_check
        _
      $region379: #{_proden_loss_prior.1} parent=256 // pred_check_branch
        %653 = sbr.rel (%p650) target = $region381
      $region380: #{_proden_loss_prior.1} parent=256 // pred_region
        %s668 = sand.u32 1, 7
        %p669 = scmp.eq.s32.totalorder %s668, 0
        %p670 = pneg %p669
        // Predicated region
        $region393: #{_proden_loss_prior.1} parent=380 // pred_check
          _
        $region394: #{_proden_loss_prior.1} parent=380 // pred_check_branch
          %672 = sbr.rel (%p669) target = $region396
        $region395: #{_proden_loss_prior.1} parent=380 // pred_region
          %s673 = sand.u32 1, 7
          %s674 = ssub.s32 1, %s673
          %s675 = scalar_lea.vmem %s646, %s674
          %s676 = ssub.s32 1, %s673
          %s677 = scalar_lea.vmem %s648, %s676 [#allocation2]
          %s678 = sshllo.u32 0, %s673
          loop: start=0, step=1, limit=1
          $region397: #{_proden_loss_prior.1} parent=395 // loop_pre_header
            _
          $region398: #{_proden_loss_prior.1} parent=395 // loop_header
            %s680 = sphi 0, %s684
            %p681 = scmp.ge.s32.totalorder %s680, 1
            %s685 = sphi %s675, %s675
            %s686 = sphi %s677, %s677
          $region399: #{_proden_loss_prior.1} parent=395 // loop_header_branch
            %683 = sbr.rel (%p681) target = $region403
          $region400: #{_proden_loss_prior.1} parent=395 // loop_body
            %v687 = vld [vmem:[%s685] sm:%s678]
            %688 = vst [vmem:[%s686] sm:%s678] %v687
          $region401: #{_proden_loss_prior.1} parent=395 // loop_footer
            %s684 = sadd.s32 1, %s680
          $region402: #{_proden_loss_prior.1} parent=395 // loop_footer_branch
            %679 = sbr.rel target = $region398
          $region403: #{_proden_loss_prior.1} parent=395 // loop_exit
            _
        $region396: #{_proden_loss_prior.1} parent=380 // pred_fallthru
          _
      $region381: #{_proden_loss_prior.1} parent=256 // pred_fallthru
        _
      // Predicated region
      $region382: #{_proden_loss_prior.1} parent=256 // pred_check
        %p654 = pneg %p650
      $region383: #{_proden_loss_prior.1} parent=256 // pred_check_branch
        %656 = sbr.rel (%p654) target = $region385
      $region384: #{_proden_loss_prior.1} parent=256 // pred_region
        %s657 = sshllo.u32 0, 1
        loop: start=0, step=1, limit=1
        $region386: #{_proden_loss_prior.1} parent=384 // loop_pre_header
          _
        $region387: #{_proden_loss_prior.1} parent=384 // loop_header
          %s659 = sphi 0, %s663
          %p660 = scmp.ge.s32.totalorder %s659, 1
          %s664 = sphi %s646, %s646
          %s665 = sphi %s648, %s648
        $region388: #{_proden_loss_prior.1} parent=384 // loop_header_branch
          %662 = sbr.rel (%p660) target = $region392
        $region389: #{_proden_loss_prior.1} parent=384 // loop_body
          %v666 = vld [vmem:[%s664] sm:%s657]
          %667 = vst [vmem:[%s665] sm:%s657] %v666
        $region390: #{_proden_loss_prior.1} parent=384 // loop_footer
          %s663 = sadd.s32 1, %s659
        $region391: #{_proden_loss_prior.1} parent=384 // loop_footer_branch
          %658 = sbr.rel target = $region387
        $region392: #{_proden_loss_prior.1} parent=384 // loop_exit
          _
      $region385: #{_proden_loss_prior.1} parent=256 // pred_fallthru
        _
      // Predicated region
      $region404: #{_proden_loss_prior.1} parent=256 // pred_check
        _
      $region405: #{_proden_loss_prior.1} parent=256 // pred_check_branch
        %691 = sbr.rel (0) target = $region407
      $region406: #{_proden_loss_prior.1} parent=256 // pred_region
        %692 = vsyncadd [#allocation4], 16
      $region407: #{_proden_loss_prior.1} parent=256 // pred_fallthru
        _
      %s693 = sadd.s32 %s448, 5
      %s694 = sld [smem:[#allocation7 + %s693]]
      %s695 = scalar_lea.vmem %s3, %s694
      %s696 = sadd.s32 5, %s451
      %s697 = scalar_lea.vmem [#allocation2], %s696
      %p699 = scmp.lt.u32.totalorder 1, 8
      %p700 = pneg %p699
      // Predicated region
      $region408: #{_proden_loss_prior.1} parent=256 // pred_check
        _
      $region409: #{_proden_loss_prior.1} parent=256 // pred_check_branch
        %702 = sbr.rel (%p699) target = $region411
      $region410: #{_proden_loss_prior.1} parent=256 // pred_region
        %s717 = sand.u32 1, 7
        %p718 = scmp.eq.s32.totalorder %s717, 0
        %p719 = pneg %p718
        // Predicated region
        $region423: #{_proden_loss_prior.1} parent=410 // pred_check
          _
        $region424: #{_proden_loss_prior.1} parent=410 // pred_check_branch
          %721 = sbr.rel (%p718) target = $region426
        $region425: #{_proden_loss_prior.1} parent=410 // pred_region
          %s722 = sand.u32 1, 7
          %s723 = ssub.s32 1, %s722
          %s724 = scalar_lea.vmem %s695, %s723
          %s725 = ssub.s32 1, %s722
          %s726 = scalar_lea.vmem %s697, %s725 [#allocation2]
          %s727 = sshllo.u32 0, %s722
          loop: start=0, step=1, limit=1
          $region427: #{_proden_loss_prior.1} parent=425 // loop_pre_header
            _
          $region428: #{_proden_loss_prior.1} parent=425 // loop_header
            %s729 = sphi 0, %s733
            %p730 = scmp.ge.s32.totalorder %s729, 1
            %s734 = sphi %s724, %s724
            %s735 = sphi %s726, %s726
          $region429: #{_proden_loss_prior.1} parent=425 // loop_header_branch
            %732 = sbr.rel (%p730) target = $region433
          $region430: #{_proden_loss_prior.1} parent=425 // loop_body
            %v736 = vld [vmem:[%s734] sm:%s727]
            %737 = vst [vmem:[%s735] sm:%s727] %v736
          $region431: #{_proden_loss_prior.1} parent=425 // loop_footer
            %s733 = sadd.s32 1, %s729
          $region432: #{_proden_loss_prior.1} parent=425 // loop_footer_branch
            %728 = sbr.rel target = $region428
          $region433: #{_proden_loss_prior.1} parent=425 // loop_exit
            _
        $region426: #{_proden_loss_prior.1} parent=410 // pred_fallthru
          _
      $region411: #{_proden_loss_prior.1} parent=256 // pred_fallthru
        _
      // Predicated region
      $region412: #{_proden_loss_prior.1} parent=256 // pred_check
        %p703 = pneg %p699
      $region413: #{_proden_loss_prior.1} parent=256 // pred_check_branch
        %705 = sbr.rel (%p703) target = $region415
      $region414: #{_proden_loss_prior.1} parent=256 // pred_region
        %s706 = sshllo.u32 0, 1
        loop: start=0, step=1, limit=1
        $region416: #{_proden_loss_prior.1} parent=414 // loop_pre_header
          _
        $region417: #{_proden_loss_prior.1} parent=414 // loop_header
          %s708 = sphi 0, %s712
          %p709 = scmp.ge.s32.totalorder %s708, 1
          %s713 = sphi %s695, %s695
          %s714 = sphi %s697, %s697
        $region418: #{_proden_loss_prior.1} parent=414 // loop_header_branch
          %711 = sbr.rel (%p709) target = $region422
        $region419: #{_proden_loss_prior.1} parent=414 // loop_body
          %v715 = vld [vmem:[%s713] sm:%s706]
          %716 = vst [vmem:[%s714] sm:%s706] %v715
        $region420: #{_proden_loss_prior.1} parent=414 // loop_footer
          %s712 = sadd.s32 1, %s708
        $region421: #{_proden_loss_prior.1} parent=414 // loop_footer_branch
          %707 = sbr.rel target = $region417
        $region422: #{_proden_loss_prior.1} parent=414 // loop_exit
          _
      $region415: #{_proden_loss_prior.1} parent=256 // pred_fallthru
        _
      // Predicated region
      $region434: #{_proden_loss_prior.1} parent=256 // pred_check
        _
      $region435: #{_proden_loss_prior.1} parent=256 // pred_check_branch
        %740 = sbr.rel (0) target = $region437
      $region436: #{_proden_loss_prior.1} parent=256 // pred_region
        %741 = vsyncadd [#allocation4], 16
      $region437: #{_proden_loss_prior.1} parent=256 // pred_fallthru
        _
      %s742 = sadd.s32 %s448, 6
      %s743 = sld [smem:[#allocation7 + %s742]]
      %s744 = scalar_lea.vmem %s3, %s743
      %s745 = sadd.s32 6, %s451
      %s746 = scalar_lea.vmem [#allocation2], %s745
      %p748 = scmp.lt.u32.totalorder 1, 8
      %p749 = pneg %p748
      // Predicated region
      $region438: #{_proden_loss_prior.1} parent=256 // pred_check
        _
      $region439: #{_proden_loss_prior.1} parent=256 // pred_check_branch
        %751 = sbr.rel (%p748) target = $region441
      $region440: #{_proden_loss_prior.1} parent=256 // pred_region
        %s766 = sand.u32 1, 7
        %p767 = scmp.eq.s32.totalorder %s766, 0
        %p768 = pneg %p767
        // Predicated region
        $region453: #{_proden_loss_prior.1} parent=440 // pred_check
          _
        $region454: #{_proden_loss_prior.1} parent=440 // pred_check_branch
          %770 = sbr.rel (%p767) target = $region456
        $region455: #{_proden_loss_prior.1} parent=440 // pred_region
          %s771 = sand.u32 1, 7
          %s772 = ssub.s32 1, %s771
          %s773 = scalar_lea.vmem %s744, %s772
          %s774 = ssub.s32 1, %s771
          %s775 = scalar_lea.vmem %s746, %s774 [#allocation2]
          %s776 = sshllo.u32 0, %s771
          loop: start=0, step=1, limit=1
          $region457: #{_proden_loss_prior.1} parent=455 // loop_pre_header
            _
          $region458: #{_proden_loss_prior.1} parent=455 // loop_header
            %s778 = sphi 0, %s782
            %p779 = scmp.ge.s32.totalorder %s778, 1
            %s783 = sphi %s773, %s773
            %s784 = sphi %s775, %s775
          $region459: #{_proden_loss_prior.1} parent=455 // loop_header_branch
            %781 = sbr.rel (%p779) target = $region463
          $region460: #{_proden_loss_prior.1} parent=455 // loop_body
            %v785 = vld [vmem:[%s783] sm:%s776]
            %786 = vst [vmem:[%s784] sm:%s776] %v785
          $region461: #{_proden_loss_prior.1} parent=455 // loop_footer
            %s782 = sadd.s32 1, %s778
          $region462: #{_proden_loss_prior.1} parent=455 // loop_footer_branch
            %777 = sbr.rel target = $region458
          $region463: #{_proden_loss_prior.1} parent=455 // loop_exit
            _
        $region456: #{_proden_loss_prior.1} parent=440 // pred_fallthru
          _
      $region441: #{_proden_loss_prior.1} parent=256 // pred_fallthru
        _
      // Predicated region
      $region442: #{_proden_loss_prior.1} parent=256 // pred_check
        %p752 = pneg %p748
      $region443: #{_proden_loss_prior.1} parent=256 // pred_check_branch
        %754 = sbr.rel (%p752) target = $region445
      $region444: #{_proden_loss_prior.1} parent=256 // pred_region
        %s755 = sshllo.u32 0, 1
        loop: start=0, step=1, limit=1
        $region446: #{_proden_loss_prior.1} parent=444 // loop_pre_header
          _
        $region447: #{_proden_loss_prior.1} parent=444 // loop_header
          %s757 = sphi 0, %s761
          %p758 = scmp.ge.s32.totalorder %s757, 1
          %s762 = sphi %s744, %s744
          %s763 = sphi %s746, %s746
        $region448: #{_proden_loss_prior.1} parent=444 // loop_header_branch
          %760 = sbr.rel (%p758) target = $region452
        $region449: #{_proden_loss_prior.1} parent=444 // loop_body
          %v764 = vld [vmem:[%s762] sm:%s755]
          %765 = vst [vmem:[%s763] sm:%s755] %v764
        $region450: #{_proden_loss_prior.1} parent=444 // loop_footer
          %s761 = sadd.s32 1, %s757
        $region451: #{_proden_loss_prior.1} parent=444 // loop_footer_branch
          %756 = sbr.rel target = $region447
        $region452: #{_proden_loss_prior.1} parent=444 // loop_exit
          _
      $region445: #{_proden_loss_prior.1} parent=256 // pred_fallthru
        _
      // Predicated region
      $region464: #{_proden_loss_prior.1} parent=256 // pred_check
        _
      $region465: #{_proden_loss_prior.1} parent=256 // pred_check_branch
        %789 = sbr.rel (0) target = $region467
      $region466: #{_proden_loss_prior.1} parent=256 // pred_region
        %790 = vsyncadd [#allocation4], 16
      $region467: #{_proden_loss_prior.1} parent=256 // pred_fallthru
        _
      %s791 = sadd.s32 %s448, 7
      %s792 = sld [smem:[#allocation7 + %s791]]
      %s793 = scalar_lea.vmem %s3, %s792
      %s794 = sadd.s32 7, %s451
      %s795 = scalar_lea.vmem [#allocation2], %s794
      %p797 = scmp.lt.u32.totalorder 1, 8
      %p798 = pneg %p797
      // Predicated region
      $region468: #{_proden_loss_prior.1} parent=256 // pred_check
        _
      $region469: #{_proden_loss_prior.1} parent=256 // pred_check_branch
        %800 = sbr.rel (%p797) target = $region471
      $region470: #{_proden_loss_prior.1} parent=256 // pred_region
        %s815 = sand.u32 1, 7
        %p816 = scmp.eq.s32.totalorder %s815, 0
        %p817 = pneg %p816
        // Predicated region
        $region483: #{_proden_loss_prior.1} parent=470 // pred_check
          _
        $region484: #{_proden_loss_prior.1} parent=470 // pred_check_branch
          %819 = sbr.rel (%p816) target = $region486
        $region485: #{_proden_loss_prior.1} parent=470 // pred_region
          %s820 = sand.u32 1, 7
          %s821 = ssub.s32 1, %s820
          %s822 = scalar_lea.vmem %s793, %s821
          %s823 = ssub.s32 1, %s820
          %s824 = scalar_lea.vmem %s795, %s823 [#allocation2]
          %s825 = sshllo.u32 0, %s820
          loop: start=0, step=1, limit=1
          $region487: #{_proden_loss_prior.1} parent=485 // loop_pre_header
            _
          $region488: #{_proden_loss_prior.1} parent=485 // loop_header
            %s827 = sphi 0, %s831
            %p828 = scmp.ge.s32.totalorder %s827, 1
            %s832 = sphi %s822, %s822
            %s833 = sphi %s824, %s824
          $region489: #{_proden_loss_prior.1} parent=485 // loop_header_branch
            %830 = sbr.rel (%p828) target = $region493
          $region490: #{_proden_loss_prior.1} parent=485 // loop_body
            %v834 = vld [vmem:[%s832] sm:%s825]
            %835 = vst [vmem:[%s833] sm:%s825] %v834
          $region491: #{_proden_loss_prior.1} parent=485 // loop_footer
            %s831 = sadd.s32 1, %s827
          $region492: #{_proden_loss_prior.1} parent=485 // loop_footer_branch
            %826 = sbr.rel target = $region488
          $region493: #{_proden_loss_prior.1} parent=485 // loop_exit
            _
        $region486: #{_proden_loss_prior.1} parent=470 // pred_fallthru
          _
      $region471: #{_proden_loss_prior.1} parent=256 // pred_fallthru
        _
      // Predicated region
      $region472: #{_proden_loss_prior.1} parent=256 // pred_check
        %p801 = pneg %p797
      $region473: #{_proden_loss_prior.1} parent=256 // pred_check_branch
        %803 = sbr.rel (%p801) target = $region475
      $region474: #{_proden_loss_prior.1} parent=256 // pred_region
        %s804 = sshllo.u32 0, 1
        loop: start=0, step=1, limit=1
        $region476: #{_proden_loss_prior.1} parent=474 // loop_pre_header
          _
        $region477: #{_proden_loss_prior.1} parent=474 // loop_header
          %s806 = sphi 0, %s810
          %p807 = scmp.ge.s32.totalorder %s806, 1
          %s811 = sphi %s793, %s793
          %s812 = sphi %s795, %s795
        $region478: #{_proden_loss_prior.1} parent=474 // loop_header_branch
          %809 = sbr.rel (%p807) target = $region482
        $region479: #{_proden_loss_prior.1} parent=474 // loop_body
          %v813 = vld [vmem:[%s811] sm:%s804]
          %814 = vst [vmem:[%s812] sm:%s804] %v813
        $region480: #{_proden_loss_prior.1} parent=474 // loop_footer
          %s810 = sadd.s32 1, %s806
        $region481: #{_proden_loss_prior.1} parent=474 // loop_footer_branch
          %805 = sbr.rel target = $region477
        $region482: #{_proden_loss_prior.1} parent=474 // loop_exit
          _
      $region475: #{_proden_loss_prior.1} parent=256 // pred_fallthru
        _
      // Predicated region
      $region494: #{_proden_loss_prior.1} parent=256 // pred_check
        _
      $region495: #{_proden_loss_prior.1} parent=256 // pred_check_branch
        %838 = sbr.rel (0) target = $region497
      $region496: #{_proden_loss_prior.1} parent=256 // pred_region
        %839 = vsyncadd [#allocation4], 16
      $region497: #{_proden_loss_prior.1} parent=256 // pred_fallthru
        _
    $region257: #{_proden_loss_prior.1} parent=1 // pred_fallthru
      _
    %v840 = vld [vmem:[%s438] sm:$0xff]
    %vm841 = vcmp.gt.f32.partialorder %v840, 0.0
    %vm842 = vcmp.eq.f32.partialorder %v840, 0.0
    %v843 = vsel %vm842, 1, 0
    %v844 = vcvt.s32.f32 %v843
    %v845 = vsub.f32 1.0, %v421
    %v846 = vmax.f32 %v845, 0.0
    %v847 = vsub.f32 1.0, %v433
    %v848 = vmax.f32 %v847, 0.0
    %v849 = vlog2.pop %v846
    %v850 = vmul.f32 %v849, 0.6931472
    %v851 = vsub.f32 0.0, %v850
    %v852 = vlog2.pop %v848
    %v853 = vmul.f32 %v852, 0.6931472
    %v854 = vsub.f32 %v851, %v853
    %v855 = vmul.f32 %v844, %v854
    %v856 = vsel %vm841, %v840, 1.0
    %v857 = vlog2.pop %v856
    %v858 = vmul.f32 %v857, 0.6931472
    %v859 = vmul.f32 %v858, 2.0
    %v860 = vadd.f32 %v424, %v436
    %v861 = vsub.f32 %v859, %v860
    %v862 = vmul.f32 %v840, %v861
    %v863 = vsel %vm841, %v862, 0.0
    %v864 = vadd.f32 %v855, %v863
    %865 = vadd.xlane.f32.xlu0 %v864
    %v866 = vpop.xlane.xlu0 %865
    %v867 = vrot.slane %v866, 4
    %v868 = vadd.f32 %v866, %v867
    %v869 = vrot.slane %v868, 2
    %v870 = vadd.f32 %v868, %v869
    %v871 = vrot.slane %v870, 1
    %v872 = vadd.f32 %v870, %v871
    %v873 = vld [vmem:[#allocation8] sm:$0x1]
    %v874 = vmul.f32 %v872, 0.125
    %v875 = vadd.f32 %v873, %v874
    %vm876 = vcmask 0
    %877 = vst.msk [vmem:[#allocation8] sm:$0x1] %vm876, %v875
    %v878 = vsel %vm841, 1, 0
    %v879 = vcvt.s32.f32 %v878
    %v880 = vmul.f32 %v879, %v433
    %v881 = vmul.f32 %v880, %v421
    %v882 = vrsqrt.pop %v881
    %v883 = vmul.f32 %v881, %v882
    %vm884 = vcmp.eq.f32.partialorder %v881, inf
    %v885 = vsel %vm884, %v881, %v883
    %vm886 = vcmp.eq.f32.partialorder %v881, 0.0
    %v887 = vand.u32 %v881, 2147483648
    %v888 = vsel %vm886, %v887, %v885
    %889 = vadd.xlane.f32.xlu0 %v888
    %v890 = vpop.xlane.xlu0 %889
    %vm891 = vcmp.gt.f32.partialorder %v890, 0.0
    %v892 = vsel %vm891, %v890, 1.0
    %v893 = vrcp.pop %v892
    %v894 = vmul.f32 %v888, %v893
    %p895 = scmp.gt.s32.totalorder 0, 0
    // Predicated region
    $region498: #{_proden_loss_prior.1} parent=1 // pred_check
      %p896 = pneg %p895
    $region499: #{_proden_loss_prior.1} parent=1 // pred_check_branch
      %898 = sbr.rel (%p896) target = $region501
    $region500: #{_proden_loss_prior.1} parent=1 // pred_region
      %s899 = sshll.u32 %s439, 4
      %900 = dma.done [#allocation5], %s899
    $region501: #{_proden_loss_prior.1} parent=1 // pred_fallthru
      _
    %901 = vst [vmem:[#allocation3] sm:$0xff] %v894
    %s902 = smul.u32 0, 8
    %s903 = sld [smem:[#allocation7 + %s902]]
    %s904 = scalar_lea.vmem %s5, %s903
    %p906 = scmp.lt.u32.totalorder 1, 8
    %p907 = pneg %p906
    // Predicated region
    $region502: #{_proden_loss_prior.1} parent=1 // pred_check
      _
    $region503: #{_proden_loss_prior.1} parent=1 // pred_check_branch
      %909 = sbr.rel (%p906) target = $region505
    $region504: #{_proden_loss_prior.1} parent=1 // pred_region
      %s924 = sand.u32 1, 7
      %p925 = scmp.eq.s32.totalorder %s924, 0
      %p926 = pneg %p925
      // Predicated region
      $region517: #{_proden_loss_prior.1} parent=504 // pred_check
        _
      $region518: #{_proden_loss_prior.1} parent=504 // pred_check_branch
        %928 = sbr.rel (%p925) target = $region520
      $region519: #{_proden_loss_prior.1} parent=504 // pred_region
        %s929 = sand.u32 1, 7
        %s930 = ssub.s32 1, %s929
        %s931 = scalar_lea.vmem [#allocation3], %s930
        %s932 = ssub.s32 1, %s929
        %s933 = scalar_lea.vmem %s904, %s932
        %s934 = sshllo.u32 0, %s929
        loop: start=0, step=1, limit=1
        $region521: #{_proden_loss_prior.1} parent=519 // loop_pre_header
          _
        $region522: #{_proden_loss_prior.1} parent=519 // loop_header
          %s936 = sphi 0, %s940
          %p937 = scmp.ge.s32.totalorder %s936, 1
          %s941 = sphi %s931, %s931
          %s942 = sphi %s933, %s933
        $region523: #{_proden_loss_prior.1} parent=519 // loop_header_branch
          %939 = sbr.rel (%p937) target = $region527
        $region524: #{_proden_loss_prior.1} parent=519 // loop_body
          %v943 = vld [vmem:[%s941] sm:%s934]
          %944 = vst [vmem:[%s942] sm:%s934] %v943
        $region525: #{_proden_loss_prior.1} parent=519 // loop_footer
          %s940 = sadd.s32 1, %s936
        $region526: #{_proden_loss_prior.1} parent=519 // loop_footer_branch
          %935 = sbr.rel target = $region522
        $region527: #{_proden_loss_prior.1} parent=519 // loop_exit
          _
      $region520: #{_proden_loss_prior.1} parent=504 // pred_fallthru
        _
    $region505: #{_proden_loss_prior.1} parent=1 // pred_fallthru
      _
    // Predicated region
    $region506: #{_proden_loss_prior.1} parent=1 // pred_check
      %p910 = pneg %p906
    $region507: #{_proden_loss_prior.1} parent=1 // pred_check_branch
      %912 = sbr.rel (%p910) target = $region509
    $region508: #{_proden_loss_prior.1} parent=1 // pred_region
      %s913 = sshllo.u32 0, 1
      loop: start=0, step=1, limit=1
      $region510: #{_proden_loss_prior.1} parent=508 // loop_pre_header
        _
      $region511: #{_proden_loss_prior.1} parent=508 // loop_header
        %s915 = sphi 0, %s919
        %p916 = scmp.ge.s32.totalorder %s915, 1
        %s920 = sphi [#allocation3], [#allocation3]
        %s921 = sphi %s904, %s904
      $region512: #{_proden_loss_prior.1} parent=508 // loop_header_branch
        %918 = sbr.rel (%p916) target = $region516
      $region513: #{_proden_loss_prior.1} parent=508 // loop_body
        %v922 = vld [vmem:[%s920] sm:%s913]
        %923 = vst [vmem:[%s921] sm:%s913] %v922
      $region514: #{_proden_loss_prior.1} parent=508 // loop_footer
        %s919 = sadd.s32 1, %s915
      $region515: #{_proden_loss_prior.1} parent=508 // loop_footer_branch
        %914 = sbr.rel target = $region511
      $region516: #{_proden_loss_prior.1} parent=508 // loop_exit
        _
    $region509: #{_proden_loss_prior.1} parent=1 // pred_fallthru
      _
    // Predicated region
    $region528: #{_proden_loss_prior.1} parent=1 // pred_check
      _
    $region529: #{_proden_loss_prior.1} parent=1 // pred_check_branch
      %947 = sbr.rel (0) target = $region531
    $region530: #{_proden_loss_prior.1} parent=1 // pred_region
      %948 = vsyncadd [#allocation5], 16
    $region531: #{_proden_loss_prior.1} parent=1 // pred_fallthru
      _
    %s949 = sadd.s32 %s902, 1
    %s950 = sld [smem:[#allocation7 + %s949]]
    %s951 = scalar_lea.vmem [#allocation3], 1
    %s952 = scalar_lea.vmem %s5, %s950
    %p954 = scmp.lt.u32.totalorder 1, 8
    %p955 = pneg %p954
    // Predicated region
    $region532: #{_proden_loss_prior.1} parent=1 // pred_check
      _
    $region533: #{_proden_loss_prior.1} parent=1 // pred_check_branch
      %957 = sbr.rel (%p954) target = $region535
    $region534: #{_proden_loss_prior.1} parent=1 // pred_region
      %s972 = sand.u32 1, 7
      %p973 = scmp.eq.s32.totalorder %s972, 0
      %p974 = pneg %p973
      // Predicated region
      $region547: #{_proden_loss_prior.1} parent=534 // pred_check
        _
      $region548: #{_proden_loss_prior.1} parent=534 // pred_check_branch
        %976 = sbr.rel (%p973) target = $region550
      $region549: #{_proden_loss_prior.1} parent=534 // pred_region
        %s977 = sand.u32 1, 7
        %s978 = ssub.s32 1, %s977
        %s979 = scalar_lea.vmem %s951, %s978 [#allocation3]
        %s980 = ssub.s32 1, %s977
        %s981 = scalar_lea.vmem %s952, %s980
        %s982 = sshllo.u32 0, %s977
        loop: start=0, step=1, limit=1
        $region551: #{_proden_loss_prior.1} parent=549 // loop_pre_header
          _
        $region552: #{_proden_loss_prior.1} parent=549 // loop_header
          %s984 = sphi 0, %s988
          %p985 = scmp.ge.s32.totalorder %s984, 1
          %s989 = sphi %s979, %s979
          %s990 = sphi %s981, %s981
        $region553: #{_proden_loss_prior.1} parent=549 // loop_header_branch
          %987 = sbr.rel (%p985) target = $region557
        $region554: #{_proden_loss_prior.1} parent=549 // loop_body
          %v991 = vld [vmem:[%s989] sm:%s982]
          %992 = vst [vmem:[%s990] sm:%s982] %v991
        $region555: #{_proden_loss_prior.1} parent=549 // loop_footer
          %s988 = sadd.s32 1, %s984
        $region556: #{_proden_loss_prior.1} parent=549 // loop_footer_branch
          %983 = sbr.rel target = $region552
        $region557: #{_proden_loss_prior.1} parent=549 // loop_exit
          _
      $region550: #{_proden_loss_prior.1} parent=534 // pred_fallthru
        _
    $region535: #{_proden_loss_prior.1} parent=1 // pred_fallthru
      _
    // Predicated region
    $region536: #{_proden_loss_prior.1} parent=1 // pred_check
      %p958 = pneg %p954
    $region537: #{_proden_loss_prior.1} parent=1 // pred_check_branch
      %960 = sbr.rel (%p958) target = $region539
    $region538: #{_proden_loss_prior.1} parent=1 // pred_region
      %s961 = sshllo.u32 0, 1
      loop: start=0, step=1, limit=1
      $region540: #{_proden_loss_prior.1} parent=538 // loop_pre_header
        _
      $region541: #{_proden_loss_prior.1} parent=538 // loop_header
        %s963 = sphi 0, %s967
        %p964 = scmp.ge.s32.totalorder %s963, 1
        %s968 = sphi %s951, %s951
        %s969 = sphi %s952, %s952
      $region542: #{_proden_loss_prior.1} parent=538 // loop_header_branch
        %966 = sbr.rel (%p964) target = $region546
      $region543: #{_proden_loss_prior.1} parent=538 // loop_body
        %v970 = vld [vmem:[%s968] sm:%s961]
        %971 = vst [vmem:[%s969] sm:%s961] %v970
      $region544: #{_proden_loss_prior.1} parent=538 // loop_footer
        %s967 = sadd.s32 1, %s963
      $region545: #{_proden_loss_prior.1} parent=538 // loop_footer_branch
        %962 = sbr.rel target = $region541
      $region546: #{_proden_loss_prior.1} parent=538 // loop_exit
        _
    $region539: #{_proden_loss_prior.1} parent=1 // pred_fallthru
      _
    // Predicated region
    $region558: #{_proden_loss_prior.1} parent=1 // pred_check
      _
    $region559: #{_proden_loss_prior.1} parent=1 // pred_check_branch
      %995 = sbr.rel (0) target = $region561
    $region560: #{_proden_loss_prior.1} parent=1 // pred_region
      %996 = vsyncadd [#allocation5], 16
    $region561: #{_proden_loss_prior.1} parent=1 // pred_fallthru
      _
    %s997 = sadd.s32 %s902, 2
    %s998 = sld [smem:[#allocation7 + %s997]]
    %s999 = scalar_lea.vmem [#allocation3], 2
    %s1000 = scalar_lea.vmem %s5, %s998
    %p1002 = scmp.lt.u32.totalorder 1, 8
    %p1003 = pneg %p1002
    // Predicated region
    $region562: #{_proden_loss_prior.1} parent=1 // pred_check
      _
    $region563: #{_proden_loss_prior.1} parent=1 // pred_check_branch
      %1005 = sbr.rel (%p1002) target = $region565
    $region564: #{_proden_loss_prior.1} parent=1 // pred_region
      %s1020 = sand.u32 1, 7
      %p1021 = scmp.eq.s32.totalorder %s1020, 0
      %p1022 = pneg %p1021
      // Predicated region
      $region577: #{_proden_loss_prior.1} parent=564 // pred_check
        _
      $region578: #{_proden_loss_prior.1} parent=564 // pred_check_branch
        %1024 = sbr.rel (%p1021) target = $region580
      $region579: #{_proden_loss_prior.1} parent=564 // pred_region
        %s1025 = sand.u32 1, 7
        %s1026 = ssub.s32 1, %s1025
        %s1027 = scalar_lea.vmem %s999, %s1026 [#allocation3]
        %s1028 = ssub.s32 1, %s1025
        %s1029 = scalar_lea.vmem %s1000, %s1028
        %s1030 = sshllo.u32 0, %s1025
        loop: start=0, step=1, limit=1
        $region581: #{_proden_loss_prior.1} parent=579 // loop_pre_header
          _
        $region582: #{_proden_loss_prior.1} parent=579 // loop_header
          %s1032 = sphi 0, %s1036
          %p1033 = scmp.ge.s32.totalorder %s1032, 1
          %s1037 = sphi %s1027, %s1027
          %s1038 = sphi %s1029, %s1029
        $region583: #{_proden_loss_prior.1} parent=579 // loop_header_branch
          %1035 = sbr.rel (%p1033) target = $region587
        $region584: #{_proden_loss_prior.1} parent=579 // loop_body
          %v1039 = vld [vmem:[%s1037] sm:%s1030]
          %1040 = vst [vmem:[%s1038] sm:%s1030] %v1039
        $region585: #{_proden_loss_prior.1} parent=579 // loop_footer
          %s1036 = sadd.s32 1, %s1032
        $region586: #{_proden_loss_prior.1} parent=579 // loop_footer_branch
          %1031 = sbr.rel target = $region582
        $region587: #{_proden_loss_prior.1} parent=579 // loop_exit
          _
      $region580: #{_proden_loss_prior.1} parent=564 // pred_fallthru
        _
    $region565: #{_proden_loss_prior.1} parent=1 // pred_fallthru
      _
    // Predicated region
    $region566: #{_proden_loss_prior.1} parent=1 // pred_check
      %p1006 = pneg %p1002
    $region567: #{_proden_loss_prior.1} parent=1 // pred_check_branch
      %1008 = sbr.rel (%p1006) target = $region569
    $region568: #{_proden_loss_prior.1} parent=1 // pred_region
      %s1009 = sshllo.u32 0, 1
      loop: start=0, step=1, limit=1
      $region570: #{_proden_loss_prior.1} parent=568 // loop_pre_header
        _
      $region571: #{_proden_loss_prior.1} parent=568 // loop_header
        %s1011 = sphi 0, %s1015
        %p1012 = scmp.ge.s32.totalorder %s1011, 1
        %s1016 = sphi %s999, %s999
        %s1017 = sphi %s1000, %s1000
      $region572: #{_proden_loss_prior.1} parent=568 // loop_header_branch
        %1014 = sbr.rel (%p1012) target = $region576
      $region573: #{_proden_loss_prior.1} parent=568 // loop_body
        %v1018 = vld [vmem:[%s1016] sm:%s1009]
        %1019 = vst [vmem:[%s1017] sm:%s1009] %v1018
      $region574: #{_proden_loss_prior.1} parent=568 // loop_footer
        %s1015 = sadd.s32 1, %s1011
      $region575: #{_proden_loss_prior.1} parent=568 // loop_footer_branch
        %1010 = sbr.rel target = $region571
      $region576: #{_proden_loss_prior.1} parent=568 // loop_exit
        _
    $region569: #{_proden_loss_prior.1} parent=1 // pred_fallthru
      _
    // Predicated region
    $region588: #{_proden_loss_prior.1} parent=1 // pred_check
      _
    $region589: #{_proden_loss_prior.1} parent=1 // pred_check_branch
      %1043 = sbr.rel (0) target = $region591
    $region590: #{_proden_loss_prior.1} parent=1 // pred_region
      %1044 = vsyncadd [#allocation5], 16
    $region591: #{_proden_loss_prior.1} parent=1 // pred_fallthru
      _
    %s1045 = sadd.s32 %s902, 3
    %s1046 = sld [smem:[#allocation7 + %s1045]]
    %s1047 = scalar_lea.vmem [#allocation3], 3
    %s1048 = scalar_lea.vmem %s5, %s1046
    %p1050 = scmp.lt.u32.totalorder 1, 8
    %p1051 = pneg %p1050
    // Predicated region
    $region592: #{_proden_loss_prior.1} parent=1 // pred_check
      _
    $region593: #{_proden_loss_prior.1} parent=1 // pred_check_branch
      %1053 = sbr.rel (%p1050) target = $region595
    $region594: #{_proden_loss_prior.1} parent=1 // pred_region
      %s1068 = sand.u32 1, 7
      %p1069 = scmp.eq.s32.totalorder %s1068, 0
      %p1070 = pneg %p1069
      // Predicated region
      $region607: #{_proden_loss_prior.1} parent=594 // pred_check
        _
      $region608: #{_proden_loss_prior.1} parent=594 // pred_check_branch
        %1072 = sbr.rel (%p1069) target = $region610
      $region609: #{_proden_loss_prior.1} parent=594 // pred_region
        %s1073 = sand.u32 1, 7
        %s1074 = ssub.s32 1, %s1073
        %s1075 = scalar_lea.vmem %s1047, %s1074 [#allocation3]
        %s1076 = ssub.s32 1, %s1073
        %s1077 = scalar_lea.vmem %s1048, %s1076
        %s1078 = sshllo.u32 0, %s1073
        loop: start=0, step=1, limit=1
        $region611: #{_proden_loss_prior.1} parent=609 // loop_pre_header
          _
        $region612: #{_proden_loss_prior.1} parent=609 // loop_header
          %s1080 = sphi 0, %s1084
          %p1081 = scmp.ge.s32.totalorder %s1080, 1
          %s1085 = sphi %s1075, %s1075
          %s1086 = sphi %s1077, %s1077
        $region613: #{_proden_loss_prior.1} parent=609 // loop_header_branch
          %1083 = sbr.rel (%p1081) target = $region617
        $region614: #{_proden_loss_prior.1} parent=609 // loop_body
          %v1087 = vld [vmem:[%s1085] sm:%s1078]
          %1088 = vst [vmem:[%s1086] sm:%s1078] %v1087
        $region615: #{_proden_loss_prior.1} parent=609 // loop_footer
          %s1084 = sadd.s32 1, %s1080
        $region616: #{_proden_loss_prior.1} parent=609 // loop_footer_branch
          %1079 = sbr.rel target = $region612
        $region617: #{_proden_loss_prior.1} parent=609 // loop_exit
          _
      $region610: #{_proden_loss_prior.1} parent=594 // pred_fallthru
        _
    $region595: #{_proden_loss_prior.1} parent=1 // pred_fallthru
      _
    // Predicated region
    $region596: #{_proden_loss_prior.1} parent=1 // pred_check
      %p1054 = pneg %p1050
    $region597: #{_proden_loss_prior.1} parent=1 // pred_check_branch
      %1056 = sbr.rel (%p1054) target = $region599
    $region598: #{_proden_loss_prior.1} parent=1 // pred_region
      %s1057 = sshllo.u32 0, 1
      loop: start=0, step=1, limit=1
      $region600: #{_proden_loss_prior.1} parent=598 // loop_pre_header
        _
      $region601: #{_proden_loss_prior.1} parent=598 // loop_header
        %s1059 = sphi 0, %s1063
        %p1060 = scmp.ge.s32.totalorder %s1059, 1
        %s1064 = sphi %s1047, %s1047
        %s1065 = sphi %s1048, %s1048
      $region602: #{_proden_loss_prior.1} parent=598 // loop_header_branch
        %1062 = sbr.rel (%p1060) target = $region606
      $region603: #{_proden_loss_prior.1} parent=598 // loop_body
        %v1066 = vld [vmem:[%s1064] sm:%s1057]
        %1067 = vst [vmem:[%s1065] sm:%s1057] %v1066
      $region604: #{_proden_loss_prior.1} parent=598 // loop_footer
        %s1063 = sadd.s32 1, %s1059
      $region605: #{_proden_loss_prior.1} parent=598 // loop_footer_branch
        %1058 = sbr.rel target = $region601
      $region606: #{_proden_loss_prior.1} parent=598 // loop_exit
        _
    $region599: #{_proden_loss_prior.1} parent=1 // pred_fallthru
      _
    // Predicated region
    $region618: #{_proden_loss_prior.1} parent=1 // pred_check
      _
    $region619: #{_proden_loss_prior.1} parent=1 // pred_check_branch
      %1091 = sbr.rel (0) target = $region621
    $region620: #{_proden_loss_prior.1} parent=1 // pred_region
      %1092 = vsyncadd [#allocation5], 16
    $region621: #{_proden_loss_prior.1} parent=1 // pred_fallthru
      _
    %s1093 = sadd.s32 %s902, 4
    %s1094 = sld [smem:[#allocation7 + %s1093]]
    %s1095 = scalar_lea.vmem [#allocation3], 4
    %s1096 = scalar_lea.vmem %s5, %s1094
    %p1098 = scmp.lt.u32.totalorder 1, 8
    %p1099 = pneg %p1098
    // Predicated region
    $region622: #{_proden_loss_prior.1} parent=1 // pred_check
      _
    $region623: #{_proden_loss_prior.1} parent=1 // pred_check_branch
      %1101 = sbr.rel (%p1098) target = $region625
    $region624: #{_proden_loss_prior.1} parent=1 // pred_region
      %s1116 = sand.u32 1, 7
      %p1117 = scmp.eq.s32.totalorder %s1116, 0
      %p1118 = pneg %p1117
      // Predicated region
      $region637: #{_proden_loss_prior.1} parent=624 // pred_check
        _
      $region638: #{_proden_loss_prior.1} parent=624 // pred_check_branch
        %1120 = sbr.rel (%p1117) target = $region640
      $region639: #{_proden_loss_prior.1} parent=624 // pred_region
        %s1121 = sand.u32 1, 7
        %s1122 = ssub.s32 1, %s1121
        %s1123 = scalar_lea.vmem %s1095, %s1122 [#allocation3]
        %s1124 = ssub.s32 1, %s1121
        %s1125 = scalar_lea.vmem %s1096, %s1124
        %s1126 = sshllo.u32 0, %s1121
        loop: start=0, step=1, limit=1
        $region641: #{_proden_loss_prior.1} parent=639 // loop_pre_header
          _
        $region642: #{_proden_loss_prior.1} parent=639 // loop_header
          %s1128 = sphi 0, %s1132
          %p1129 = scmp.ge.s32.totalorder %s1128, 1
          %s1133 = sphi %s1123, %s1123
          %s1134 = sphi %s1125, %s1125
        $region643: #{_proden_loss_prior.1} parent=639 // loop_header_branch
          %1131 = sbr.rel (%p1129) target = $region647
        $region644: #{_proden_loss_prior.1} parent=639 // loop_body
          %v1135 = vld [vmem:[%s1133] sm:%s1126]
          %1136 = vst [vmem:[%s1134] sm:%s1126] %v1135
        $region645: #{_proden_loss_prior.1} parent=639 // loop_footer
          %s1132 = sadd.s32 1, %s1128
        $region646: #{_proden_loss_prior.1} parent=639 // loop_footer_branch
          %1127 = sbr.rel target = $region642
        $region647: #{_proden_loss_prior.1} parent=639 // loop_exit
          _
      $region640: #{_proden_loss_prior.1} parent=624 // pred_fallthru
        _
    $region625: #{_proden_loss_prior.1} parent=1 // pred_fallthru
      _
    // Predicated region
    $region626: #{_proden_loss_prior.1} parent=1 // pred_check
      %p1102 = pneg %p1098
    $region627: #{_proden_loss_prior.1} parent=1 // pred_check_branch
      %1104 = sbr.rel (%p1102) target = $region629
    $region628: #{_proden_loss_prior.1} parent=1 // pred_region
      %s1105 = sshllo.u32 0, 1
      loop: start=0, step=1, limit=1
      $region630: #{_proden_loss_prior.1} parent=628 // loop_pre_header
        _
      $region631: #{_proden_loss_prior.1} parent=628 // loop_header
        %s1107 = sphi 0, %s1111
        %p1108 = scmp.ge.s32.totalorder %s1107, 1
        %s1112 = sphi %s1095, %s1095
        %s1113 = sphi %s1096, %s1096
      $region632: #{_proden_loss_prior.1} parent=628 // loop_header_branch
        %1110 = sbr.rel (%p1108) target = $region636
      $region633: #{_proden_loss_prior.1} parent=628 // loop_body
        %v1114 = vld [vmem:[%s1112] sm:%s1105]
        %1115 = vst [vmem:[%s1113] sm:%s1105] %v1114
      $region634: #{_proden_loss_prior.1} parent=628 // loop_footer
        %s1111 = sadd.s32 1, %s1107
      $region635: #{_proden_loss_prior.1} parent=628 // loop_footer_branch
        %1106 = sbr.rel target = $region631
      $region636: #{_proden_loss_prior.1} parent=628 // loop_exit
        _
    $region629: #{_proden_loss_prior.1} parent=1 // pred_fallthru
      _
    // Predicated region
    $region648: #{_proden_loss_prior.1} parent=1 // pred_check
      _
    $region649: #{_proden_loss_prior.1} parent=1 // pred_check_branch
      %1139 = sbr.rel (0) target = $region651
    $region650: #{_proden_loss_prior.1} parent=1 // pred_region
      %1140 = vsyncadd [#allocation5], 16
    $region651: #{_proden_loss_prior.1} parent=1 // pred_fallthru
      _
    %s1141 = sadd.s32 %s902, 5
    %s1142 = sld [smem:[#allocation7 + %s1141]]
    %s1143 = scalar_lea.vmem [#allocation3], 5
    %s1144 = scalar_lea.vmem %s5, %s1142
    %p1146 = scmp.lt.u32.totalorder 1, 8
    %p1147 = pneg %p1146
    // Predicated region
    $region652: #{_proden_loss_prior.1} parent=1 // pred_check
      _
    $region653: #{_proden_loss_prior.1} parent=1 // pred_check_branch
      %1149 = sbr.rel (%p1146) target = $region655
    $region654: #{_proden_loss_prior.1} parent=1 // pred_region
      %s1164 = sand.u32 1, 7
      %p1165 = scmp.eq.s32.totalorder %s1164, 0
      %p1166 = pneg %p1165
      // Predicated region
      $region667: #{_proden_loss_prior.1} parent=654 // pred_check
        _
      $region668: #{_proden_loss_prior.1} parent=654 // pred_check_branch
        %1168 = sbr.rel (%p1165) target = $region670
      $region669: #{_proden_loss_prior.1} parent=654 // pred_region
        %s1169 = sand.u32 1, 7
        %s1170 = ssub.s32 1, %s1169
        %s1171 = scalar_lea.vmem %s1143, %s1170 [#allocation3]
        %s1172 = ssub.s32 1, %s1169
        %s1173 = scalar_lea.vmem %s1144, %s1172
        %s1174 = sshllo.u32 0, %s1169
        loop: start=0, step=1, limit=1
        $region671: #{_proden_loss_prior.1} parent=669 // loop_pre_header
          _
        $region672: #{_proden_loss_prior.1} parent=669 // loop_header
          %s1176 = sphi 0, %s1180
          %p1177 = scmp.ge.s32.totalorder %s1176, 1
          %s1181 = sphi %s1171, %s1171
          %s1182 = sphi %s1173, %s1173
        $region673: #{_proden_loss_prior.1} parent=669 // loop_header_branch
          %1179 = sbr.rel (%p1177) target = $region677
        $region674: #{_proden_loss_prior.1} parent=669 // loop_body
          %v1183 = vld [vmem:[%s1181] sm:%s1174]
          %1184 = vst [vmem:[%s1182] sm:%s1174] %v1183
        $region675: #{_proden_loss_prior.1} parent=669 // loop_footer
          %s1180 = sadd.s32 1, %s1176
        $region676: #{_proden_loss_prior.1} parent=669 // loop_footer_branch
          %1175 = sbr.rel target = $region672
        $region677: #{_proden_loss_prior.1} parent=669 // loop_exit
          _
      $region670: #{_proden_loss_prior.1} parent=654 // pred_fallthru
        _
    $region655: #{_proden_loss_prior.1} parent=1 // pred_fallthru
      _
    // Predicated region
    $region656: #{_proden_loss_prior.1} parent=1 // pred_check
      %p1150 = pneg %p1146
    $region657: #{_proden_loss_prior.1} parent=1 // pred_check_branch
      %1152 = sbr.rel (%p1150) target = $region659
    $region658: #{_proden_loss_prior.1} parent=1 // pred_region
      %s1153 = sshllo.u32 0, 1
      loop: start=0, step=1, limit=1
      $region660: #{_proden_loss_prior.1} parent=658 // loop_pre_header
        _
      $region661: #{_proden_loss_prior.1} parent=658 // loop_header
        %s1155 = sphi 0, %s1159
        %p1156 = scmp.ge.s32.totalorder %s1155, 1
        %s1160 = sphi %s1143, %s1143
        %s1161 = sphi %s1144, %s1144
      $region662: #{_proden_loss_prior.1} parent=658 // loop_header_branch
        %1158 = sbr.rel (%p1156) target = $region666
      $region663: #{_proden_loss_prior.1} parent=658 // loop_body
        %v1162 = vld [vmem:[%s1160] sm:%s1153]
        %1163 = vst [vmem:[%s1161] sm:%s1153] %v1162
      $region664: #{_proden_loss_prior.1} parent=658 // loop_footer
        %s1159 = sadd.s32 1, %s1155
      $region665: #{_proden_loss_prior.1} parent=658 // loop_footer_branch
        %1154 = sbr.rel target = $region661
      $region666: #{_proden_loss_prior.1} parent=658 // loop_exit
        _
    $region659: #{_proden_loss_prior.1} parent=1 // pred_fallthru
      _
    // Predicated region
    $region678: #{_proden_loss_prior.1} parent=1 // pred_check
      _
    $region679: #{_proden_loss_prior.1} parent=1 // pred_check_branch
      %1187 = sbr.rel (0) target = $region681
    $region680: #{_proden_loss_prior.1} parent=1 // pred_region
      %1188 = vsyncadd [#allocation5], 16
    $region681: #{_proden_loss_prior.1} parent=1 // pred_fallthru
      _
    %s1189 = sadd.s32 %s902, 6
    %s1190 = sld [smem:[#allocation7 + %s1189]]
    %s1191 = scalar_lea.vmem [#allocation3], 6
    %s1192 = scalar_lea.vmem %s5, %s1190
    %p1194 = scmp.lt.u32.totalorder 1, 8
    %p1195 = pneg %p1194
    // Predicated region
    $region682: #{_proden_loss_prior.1} parent=1 // pred_check
      _
    $region683: #{_proden_loss_prior.1} parent=1 // pred_check_branch
      %1197 = sbr.rel (%p1194) target = $region685
    $region684: #{_proden_loss_prior.1} parent=1 // pred_region
      %s1212 = sand.u32 1, 7
      %p1213 = scmp.eq.s32.totalorder %s1212, 0
      %p1214 = pneg %p1213
      // Predicated region
      $region697: #{_proden_loss_prior.1} parent=684 // pred_check
        _
      $region698: #{_proden_loss_prior.1} parent=684 // pred_check_branch
        %1216 = sbr.rel (%p1213) target = $region700
      $region699: #{_proden_loss_prior.1} parent=684 // pred_region
        %s1217 = sand.u32 1, 7
        %s1218 = ssub.s32 1, %s1217
        %s1219 = scalar_lea.vmem %s1191, %s1218 [#allocation3]
        %s1220 = ssub.s32 1, %s1217
        %s1221 = scalar_lea.vmem %s1192, %s1220
        %s1222 = sshllo.u32 0, %s1217
        loop: start=0, step=1, limit=1
        $region701: #{_proden_loss_prior.1} parent=699 // loop_pre_header
          _
        $region702: #{_proden_loss_prior.1} parent=699 // loop_header
          %s1224 = sphi 0, %s1228
          %p1225 = scmp.ge.s32.totalorder %s1224, 1
          %s1229 = sphi %s1219, %s1219
          %s1230 = sphi %s1221, %s1221
        $region703: #{_proden_loss_prior.1} parent=699 // loop_header_branch
          %1227 = sbr.rel (%p1225) target = $region707
        $region704: #{_proden_loss_prior.1} parent=699 // loop_body
          %v1231 = vld [vmem:[%s1229] sm:%s1222]
          %1232 = vst [vmem:[%s1230] sm:%s1222] %v1231
        $region705: #{_proden_loss_prior.1} parent=699 // loop_footer
          %s1228 = sadd.s32 1, %s1224
        $region706: #{_proden_loss_prior.1} parent=699 // loop_footer_branch
          %1223 = sbr.rel target = $region702
        $region707: #{_proden_loss_prior.1} parent=699 // loop_exit
          _
      $region700: #{_proden_loss_prior.1} parent=684 // pred_fallthru
        _
    $region685: #{_proden_loss_prior.1} parent=1 // pred_fallthru
      _
    // Predicated region
    $region686: #{_proden_loss_prior.1} parent=1 // pred_check
      %p1198 = pneg %p1194
    $region687: #{_proden_loss_prior.1} parent=1 // pred_check_branch
      %1200 = sbr.rel (%p1198) target = $region689
    $region688: #{_proden_loss_prior.1} parent=1 // pred_region
      %s1201 = sshllo.u32 0, 1
      loop: start=0, step=1, limit=1
      $region690: #{_proden_loss_prior.1} parent=688 // loop_pre_header
        _
      $region691: #{_proden_loss_prior.1} parent=688 // loop_header
        %s1203 = sphi 0, %s1207
        %p1204 = scmp.ge.s32.totalorder %s1203, 1
        %s1208 = sphi %s1191, %s1191
        %s1209 = sphi %s1192, %s1192
      $region692: #{_proden_loss_prior.1} parent=688 // loop_header_branch
        %1206 = sbr.rel (%p1204) target = $region696
      $region693: #{_proden_loss_prior.1} parent=688 // loop_body
        %v1210 = vld [vmem:[%s1208] sm:%s1201]
        %1211 = vst [vmem:[%s1209] sm:%s1201] %v1210
      $region694: #{_proden_loss_prior.1} parent=688 // loop_footer
        %s1207 = sadd.s32 1, %s1203
      $region695: #{_proden_loss_prior.1} parent=688 // loop_footer_branch
        %1202 = sbr.rel target = $region691
      $region696: #{_proden_loss_prior.1} parent=688 // loop_exit
        _
    $region689: #{_proden_loss_prior.1} parent=1 // pred_fallthru
      _
    // Predicated region
    $region708: #{_proden_loss_prior.1} parent=1 // pred_check
      _
    $region709: #{_proden_loss_prior.1} parent=1 // pred_check_branch
      %1235 = sbr.rel (0) target = $region711
    $region710: #{_proden_loss_prior.1} parent=1 // pred_region
      %1236 = vsyncadd [#allocation5], 16
    $region711: #{_proden_loss_prior.1} parent=1 // pred_fallthru
      _
    %s1237 = sadd.s32 %s902, 7
    %s1238 = sld [smem:[#allocation7 + %s1237]]
    %s1239 = scalar_lea.vmem [#allocation3], 7
    %s1240 = scalar_lea.vmem %s5, %s1238
    %p1242 = scmp.lt.u32.totalorder 1, 8
    %p1243 = pneg %p1242
    // Predicated region
    $region712: #{_proden_loss_prior.1} parent=1 // pred_check
      _
    $region713: #{_proden_loss_prior.1} parent=1 // pred_check_branch
      %1245 = sbr.rel (%p1242) target = $region715
    $region714: #{_proden_loss_prior.1} parent=1 // pred_region
      %s1260 = sand.u32 1, 7
      %p1261 = scmp.eq.s32.totalorder %s1260, 0
      %p1262 = pneg %p1261
      // Predicated region
      $region727: #{_proden_loss_prior.1} parent=714 // pred_check
        _
      $region728: #{_proden_loss_prior.1} parent=714 // pred_check_branch
        %1264 = sbr.rel (%p1261) target = $region730
      $region729: #{_proden_loss_prior.1} parent=714 // pred_region
        %s1265 = sand.u32 1, 7
        %s1266 = ssub.s32 1, %s1265
        %s1267 = scalar_lea.vmem %s1239, %s1266 [#allocation3]
        %s1268 = ssub.s32 1, %s1265
        %s1269 = scalar_lea.vmem %s1240, %s1268
        %s1270 = sshllo.u32 0, %s1265
        loop: start=0, step=1, limit=1
        $region731: #{_proden_loss_prior.1} parent=729 // loop_pre_header
          _
        $region732: #{_proden_loss_prior.1} parent=729 // loop_header
          %s1272 = sphi 0, %s1276
          %p1273 = scmp.ge.s32.totalorder %s1272, 1
          %s1277 = sphi %s1267, %s1267
          %s1278 = sphi %s1269, %s1269
        $region733: #{_proden_loss_prior.1} parent=729 // loop_header_branch
          %1275 = sbr.rel (%p1273) target = $region737
        $region734: #{_proden_loss_prior.1} parent=729 // loop_body
          %v1279 = vld [vmem:[%s1277] sm:%s1270]
          %1280 = vst [vmem:[%s1278] sm:%s1270] %v1279
        $region735: #{_proden_loss_prior.1} parent=729 // loop_footer
          %s1276 = sadd.s32 1, %s1272
        $region736: #{_proden_loss_prior.1} parent=729 // loop_footer_branch
          %1271 = sbr.rel target = $region732
        $region737: #{_proden_loss_prior.1} parent=729 // loop_exit
          _
      $region730: #{_proden_loss_prior.1} parent=714 // pred_fallthru
        _
    $region715: #{_proden_loss_prior.1} parent=1 // pred_fallthru
      _
    // Predicated region
    $region716: #{_proden_loss_prior.1} parent=1 // pred_check
      %p1246 = pneg %p1242
    $region717: #{_proden_loss_prior.1} parent=1 // pred_check_branch
      %1248 = sbr.rel (%p1246) target = $region719
    $region718: #{_proden_loss_prior.1} parent=1 // pred_region
      %s1249 = sshllo.u32 0, 1
      loop: start=0, step=1, limit=1
      $region720: #{_proden_loss_prior.1} parent=718 // loop_pre_header
        _
      $region721: #{_proden_loss_prior.1} parent=718 // loop_header
        %s1251 = sphi 0, %s1255
        %p1252 = scmp.ge.s32.totalorder %s1251, 1
        %s1256 = sphi %s1239, %s1239
        %s1257 = sphi %s1240, %s1240
      $region722: #{_proden_loss_prior.1} parent=718 // loop_header_branch
        %1254 = sbr.rel (%p1252) target = $region726
      $region723: #{_proden_loss_prior.1} parent=718 // loop_body
        %v1258 = vld [vmem:[%s1256] sm:%s1249]
        %1259 = vst [vmem:[%s1257] sm:%s1249] %v1258
      $region724: #{_proden_loss_prior.1} parent=718 // loop_footer
        %s1255 = sadd.s32 1, %s1251
      $region725: #{_proden_loss_prior.1} parent=718 // loop_footer_branch
        %1250 = sbr.rel target = $region721
      $region726: #{_proden_loss_prior.1} parent=718 // loop_exit
        _
    $region719: #{_proden_loss_prior.1} parent=1 // pred_fallthru
      _
    // Predicated region
    $region738: #{_proden_loss_prior.1} parent=1 // pred_check
      _
    $region739: #{_proden_loss_prior.1} parent=1 // pred_check_branch
      %1283 = sbr.rel (0) target = $region741
    $region740: #{_proden_loss_prior.1} parent=1 // pred_region
      %1284 = vsyncadd [#allocation5], 16
    $region741: #{_proden_loss_prior.1} parent=1 // pred_fallthru
      _
    // Predicated region
    $region742: #{_proden_loss_prior.1} parent=1 // pred_check
      %p1285 = pneg %p30
    $region743: #{_proden_loss_prior.1} parent=1 // pred_check_branch
      %1287 = sbr.rel (%p1285) target = $region745
    $region744: #{_proden_loss_prior.1} parent=1 // pred_region
      %s1288 = sshll.u32 %s439, 4
      %1289 = dma.done [#allocation5], %s1288
    $region745: #{_proden_loss_prior.1} parent=1 // pred_fallthru
      _
    // Predicated region
    $region746: #{_proden_loss_prior.1} parent=1 // pred_check
      _
    $region747: #{_proden_loss_prior.1} parent=1 // pred_check_branch
      %1291 = sbr.rel (0) target = $region749
    $region748: #{_proden_loss_prior.1} parent=1 // pred_region
      %s1293 = ssub.s32 16, 16
      %1294 = vsyncadd [#allocation9], %s1293
      %s1296 = sshll.u32 [#allocation8], 4
      %s1297 = int_to_ptr.vmem [resolvable:$true] %s1296
      %1299 = dma.vmem_to_hbm [thread:$0]  %s1297, 16, %s4, [#allocation9]
    $region749: #{_proden_loss_prior.1} parent=1 // pred_fallthru
      _
    // Predicated region
    $region750: #{_proden_loss_prior.1} parent=1 // pred_check
      _
    $region751: #{_proden_loss_prior.1} parent=1 // pred_check_branch
      %1301 = sbr.rel (0) target = $region753
    $region752: #{_proden_loss_prior.1} parent=1 // pred_region
      %1302 = dma.done [#allocation9], 16
    $region753: #{_proden_loss_prior.1} parent=1 // pred_fallthru
      _
    %1303 = vsyncpa [#allocation9], 1
  %1304 = vsyncmov [#allocation4]
  %s1305 = vpop.sfrf %1304
  %p1306 = scmp.eq.s32.totalorder %s1305, 0
  %p1307 = pneg %p1306
  %1309 = shalt.err (%p1307)
  %1310 = vsyncmov [#allocation5]
  %s1311 = vpop.sfrf %1310
  %p1312 = scmp.eq.s32.totalorder %s1311, 0
  %p1313 = pneg %p1312
  %1315 = shalt.err (%p1313)

</llo_original>
